<compile_context>
chip_gen: v6e
topology: v6e:2x2x1
jax: 0.10.0
libtpu: 0.0.40
codegen_flags: <defaults>
</compile_context>

<pallas_src>
import jax
import jax.numpy as jnp
from jax.experimental import pallas as pl
from jax.experimental.pallas import tpu as pltpu


def _round_up(x, m):
    return (x + m - 1) // m * m


def _coordatt_kernel(x_ref, pk_ref, k1_ref, b1_ref, kh_ref, bh_ref,
                     kw_ref, bw_ref, eh_ref, ew_ref, out_ref):
    f32 = jnp.float32
    x = x_ref[...]                                                   # (bn, C*HW)

    # Coordinate pooling (AdaptiveAvgPool) for the whole block: one matmul
    # against the block-diagonal pooling matrix I_C (x) P.
    yp = jnp.dot(x, pk_ref[...], preferred_element_type=f32)        # (bn, C*L)

    # conv1 (1x1, BN folded) + h_swish; channel mix via W1f^T (x) I_L.
    y = jnp.dot(yp, k1_ref[...], preferred_element_type=f32) + b1_ref[...]   # (bn, mip*L)
    y = y * (jnp.clip(y + 3.0, 0.0, 6.0) * (1.0 / 6.0))              # h_swish

    # split into h / w halves + conv_h / conv_w + sigmoid (single matmuls).
    a_h = jax.nn.sigmoid(
        jnp.dot(y, kh_ref[...], preferred_element_type=f32) + bh_ref[...])   # (bn, oup*H)
    a_w = jax.nn.sigmoid(
        jnp.dot(y, kw_ref[...], preferred_element_type=f32) + bw_ref[...])   # (bn, oup*W)

    # Broadcast the per-row / per-column gates back onto the H*W lanes via
    # one-hot expansion matmuls (keeps the big tensor lane-dense end to end).
    g_h = jnp.dot(a_h, eh_ref[...], preferred_element_type=f32)     # (bn, oup*HW)
    g_w = jnp.dot(a_w, ew_ref[...], preferred_element_type=f32)     # (bn, oup*HW)

    # out = identity * a_w * a_h  (lane-dense elementwise + full-width store)
    out_ref[...] = (x * g_h * g_w).astype(out_ref.dtype)


def coordatt_pallas(x, params, *, block_bytes=4 * 1024 * 1024,
                    vmem_limit_bytes=48 * 1024 * 1024):
    """x: (N, C, H, W) float32. params: dict of raw weights (see init_params)."""
    n, c, h, w = x.shape
    hw, L = h * w, h + w
    f32 = jnp.float32

    w1, b1 = params["w1"], params["b1"]
    gamma, beta = params["gamma"], params["beta"]
    mean, var = params["mean"], params["var"]
    wh, bh = params["wh"], params["bh"]
    ww, bw = params["ww"], params["bw"]
    mip, oup = w1.shape[0], wh.shape[0]
    assert oup == c, "broadcast in `identity * a_w * a_h` requires oup == inp"

    # --- fold eval-mode BatchNorm into conv1 ---
    inv = gamma / jnp.sqrt(var + 1e-5)
    w1f = w1 * inv[:, None]                     # (mip, C)
    b1f = (b1 - mean) * inv + beta              # (mip,)

    # --- small constant matrices (built once, DMA'd once per kernel) ---
    k = jnp.arange(hw)
    row, col = k // w, k % w
    pool = jnp.concatenate(
        [(row[:, None] == jnp.arange(h)[None, :]).astype(f32) / w,
         (col[:, None] == jnp.arange(w)[None, :]).astype(f32) / h], axis=1)   # (HW, L)
    s_h = jnp.concatenate([jnp.eye(h, dtype=f32), jnp.zeros((w, h), f32)], 0)  # (L, H)
    s_w = jnp.concatenate([jnp.zeros((h, w), f32), jnp.eye(w, dtype=f32)], 0)  # (L, W)
    e_h = (jnp.arange(h)[:, None] == row[None, :]).astype(f32)                 # (H, HW)
    e_w = (jnp.arange(w)[:, None] == col[None, :]).astype(f32)                 # (W, HW)

    pk = jnp.kron(jnp.eye(c, dtype=f32), pool)          # (C*HW, C*L)    pooling
    k1 = jnp.kron(w1f.T, jnp.eye(L, dtype=f32))         # (C*L, mip*L)   conv1+BN
    kh = jnp.kron(wh.T, s_h)                            # (mip*L, oup*H) split+conv_h
    kw = jnp.kron(ww.T, s_w)                            # (mip*L, oup*W) split+conv_w
    ehk = jnp.kron(jnp.eye(oup, dtype=f32), e_h)        # (oup*H, oup*HW) expand
    ewk = jnp.kron(jnp.eye(oup, dtype=f32), e_w)        # (oup*W, oup*HW) expand
    b1v = jnp.repeat(b1f, L)[None, :]                   # (1, mip*L)
    bhv = jnp.repeat(bh, h)[None, :]                    # (1, oup*H)
    bwv = jnp.repeat(bw, w)[None, :]                    # (1, oup*W)

    # --- batch blocking: 8-aligned block from a VMEM byte budget ---
    per_sample = c * hw * x.dtype.itemsize
    bn = max(8, (int(block_bytes) // int(per_sample)) // 8 * 8)
    n8 = _round_up(n, 8)
    bn = min(bn, n8)
    n_pad = _round_up(n8, bn)                 # static shapes, no partial blocks
    grid = (n_pad // bn,)

    x_flat = x.reshape(n, c * hw)             # contiguous reshape (free in XLA)
    if n_pad != n:
        x_flat = jnp.pad(x_flat, ((0, n_pad - n), (0, 0)))

    consts = (pk, k1, b1v, kh, bhv, kw, bwv, ehk, ewk)
    const_specs = [pl.BlockSpec(a.shape, lambda i: (0, 0)) for a in consts]

    flops = 2 * n_pad * (c * hw * c * L + c * L * mip * L
                         + mip * L * oup * (h + w)
                         + oup * h * oup * hw + oup * w * oup * hw) \
            + 8 * n_pad * c * hw
    cost = pl.CostEstimate(
        flops=int(flops),
        transcendentals=int(n_pad * oup * (h + w)),
        bytes_accessed=int(2 * n_pad * c * hw * x.dtype.itemsize))

    out_flat = pl.pallas_call(
        _coordatt_kernel,
        out_shape=jax.ShapeDtypeStruct((n_pad, c * hw), x.dtype),
        grid_spec=pltpu.PrefetchScalarGridSpec(
            num_scalar_prefetch=0,
            grid=grid,
            in_specs=[pl.BlockSpec((bn, c * hw), lambda i: (i, 0))] + const_specs,
            out_specs=pl.BlockSpec((bn, c * hw), lambda i: (i, 0)),
        ),
        compiler_params=pltpu.CompilerParams(
            dimension_semantics=("parallel",),
            vmem_limit_bytes=vmem_limit_bytes,
        ),
        cost_estimate=cost,
    )(x_flat, *consts)

    return out_flat[:n].reshape(n, c, h, w)


def init_params(key, inp, oup, reduction=32):
    """Deterministic synthetic parameters matching CoordAtt.__init__ shapes."""
    mip = max(8, inp // reduction)
    ks = jax.random.split(key, 10)
    scale = 0.2
    w1 = scale * jax.random.normal(ks[0], (mip, inp), jnp.float32)    # conv1
    b1 = scale * jax.random.normal(ks[1], (mip,), jnp.float32)
    gamma = 1.0 + 0.1 * jax.random.normal(ks[2], (mip,), jnp.float32)  # bn1
    beta = 0.1 * jax.random.normal(ks[3], (mip,), jnp.float32)
    mean = 0.05 * jax.random.normal(ks[4], (mip,), jnp.float32)
    var = jnp.abs(1.0 + 0.1 * jax.random.normal(ks[5], (mip,), jnp.float32))
    wh = scale * jax.random.normal(ks[6], (oup, mip), jnp.float32)    # conv_h
    bh = scale * jax.random.normal(ks[7], (oup,), jnp.float32)
    ww = scale * jax.random.normal(ks[8], (oup, mip), jnp.float32)    # conv_w
    bw = scale * jax.random.normal(ks[9], (oup,), jnp.float32)
    return dict(w1=w1, b1=b1, gamma=gamma, beta=beta, mean=mean, var=var,
                wh=wh, bh=bh, ww=ww, bw=bw)


def coordatt_ref(x, p):
    """Pure-JAX reference mirroring the PyTorch forward (BN in eval mode)."""
    n, c, h, w = x.shape
    x_h = jnp.mean(x, axis=3)                                   # (N, C, H)
    x_w = jnp.mean(x, axis=2)                                   # (N, C, W)
    y = jnp.concatenate([x_h, x_w], axis=2)                     # (N, C, H+W)
    y = jnp.einsum("mc,ncl->nml", p["w1"], y) + p["b1"][None, :, None]
    inv = p["gamma"] / jnp.sqrt(p["var"] + 1e-5)
    y = (y - p["mean"][None, :, None]) * inv[None, :, None] + p["beta"][None, :, None]
    y = y * (jnp.clip(y + 3.0, 0.0, 6.0) / 6.0)
    y_h, y_w = y[..., :h], y[..., h:]
    a_h = jax.nn.sigmoid(jnp.einsum("om,nml->nol", p["wh"], y_h) + p["bh"][None, :, None])
    a_w = jax.nn.sigmoid(jnp.einsum("om,nml->nol", p["ww"], y_w) + p["bw"][None, :, None])
    return x * a_h[:, :, :, None] * a_w[:, :, None, :]


if __name__ == "__main__":
    key = jax.random.PRNGKey(0)
    N, C, H, W = 2, 4, 16, 16          # inp = oup = 4, reduction=32 -> mip = 8
    kx, kp = jax.random.split(key)
    x = jax.random.normal(kx, (N, C, H, W), jnp.float32)
    params = init_params(kp, inp=C, oup=C, reduction=32)

    out = coordatt_pallas(x, params)
    out = jax.block_until_ready(out)

    ref = coordatt_ref(x, params)
    assert out.shape == (N, C, H, W)
    assert jnp.allclose(out, ref, atol=2e-5, rtol=2e-5), "mismatch vs reference"
    print("KERNEL_OK")
</pallas_src>

<mosaic_0001>
module attributes {stable_mosaic.version = 11 : i64} {
  func.func @_coordatt_kernel(%arg0: i32, %arg1: memref<8x1024xf32, #tpu.memory_space<vmem>>, %arg2: memref<1024x128xf32, #tpu.memory_space<vmem>>, %arg3: memref<128x256xf32, #tpu.memory_space<vmem>>, %arg4: memref<1x256xf32, #tpu.memory_space<vmem>>, %arg5: memref<256x64xf32, #tpu.memory_space<vmem>>, %arg6: memref<1x64xf32, #tpu.memory_space<vmem>>, %arg7: memref<256x64xf32, #tpu.memory_space<vmem>>, %arg8: memref<1x64xf32, #tpu.memory_space<vmem>>, %arg9: memref<64x1024xf32, #tpu.memory_space<vmem>>, %arg10: memref<64x1024xf32, #tpu.memory_space<vmem>>, %arg11: memref<8x1024xf32, #tpu.memory_space<vmem>>) attributes {dimension_semantics = [#tpu.dimension_semantics<parallel>], iteration_bounds = array<i64: 1>, scalar_prefetch = 0 : i64, scratch_operands = 0 : i64, tpu.core_type = #tpu.core_type<tc>, window_params = [{transform_indices = @transform_0, window_bounds = array<i64: 8, 1024>}, {pipeline_mode = #tpu.pipeline_mode<synchronous>, transform_indices = @transform_1, window_bounds = array<i64: 1024, 128>}, {pipeline_mode = #tpu.pipeline_mode<synchronous>, transform_indices = @transform_2, window_bounds = array<i64: 128, 256>}, {pipeline_mode = #tpu.pipeline_mode<synchronous>, transform_indices = @transform_3, window_bounds = array<i64: 1, 256>}, {pipeline_mode = #tpu.pipeline_mode<synchronous>, transform_indices = @transform_4, window_bounds = array<i64: 256, 64>}, {pipeline_mode = #tpu.pipeline_mode<synchronous>, transform_indices = @transform_5, window_bounds = array<i64: 1, 64>}, {pipeline_mode = #tpu.pipeline_mode<synchronous>, transform_indices = @transform_6, window_bounds = array<i64: 256, 64>}, {pipeline_mode = #tpu.pipeline_mode<synchronous>, transform_indices = @transform_7, window_bounds = array<i64: 1, 64>}, {pipeline_mode = #tpu.pipeline_mode<synchronous>, transform_indices = @transform_8, window_bounds = array<i64: 64, 1024>}, {pipeline_mode = #tpu.pipeline_mode<synchronous>, transform_indices = @transform_9, window_bounds = array<i64: 64, 1024>}, {transform_indices = @transform_10, window_bounds = array<i64: 8, 1024>}]} {
    %c0 = arith.constant 0 : index
    %c0_0 = arith.constant 0 : index
    %0 = vector.load %arg1[%c0, %c0_0] : memref<8x1024xf32, #tpu.memory_space<vmem>>, vector<8x1024xf32>
    %c0_1 = arith.constant 0 : index
    %c0_2 = arith.constant 0 : index
    %1 = vector.load %arg2[%c0_1, %c0_2] : memref<1024x128xf32, #tpu.memory_space<vmem>>, vector<1024x128xf32>
    %cst = arith.constant dense<0.000000e+00> : vector<8x128xf32>
    %2 = tpu.matmul %0, %1, %cst {dimension_numbers = #tpu.dot_dimension_numbers<[1], [0], [0], [1], [0, 0, 1, 1], [], []>} : vector<8x1024xf32>, vector<1024x128xf32>, vector<8x128xf32> -> vector<8x128xf32>
    %c0_3 = arith.constant 0 : index
    %c0_4 = arith.constant 0 : index
    %3 = vector.load %arg3[%c0_3, %c0_4] : memref<128x256xf32, #tpu.memory_space<vmem>>, vector<128x256xf32>
    %cst_5 = arith.constant dense<0.000000e+00> : vector<8x256xf32>
    %4 = tpu.matmul %2, %3, %cst_5 {dimension_numbers = #tpu.dot_dimension_numbers<[1], [0], [0], [1], [0, 0, 1, 1], [], []>} : vector<8x128xf32>, vector<128x256xf32>, vector<8x256xf32> -> vector<8x256xf32>
    %c0_6 = arith.constant 0 : index
    %c0_7 = arith.constant 0 : index
    %5 = vector.load %arg4[%c0_6, %c0_7] : memref<1x256xf32, #tpu.memory_space<vmem>>, vector<1x256xf32>
    %6 = vector.broadcast %5 : vector<1x256xf32> to vector<8x256xf32>
    %7 = arith.addf %4, %6 : vector<8x256xf32>
    %cst_8 = arith.constant 3.000000e+00 : f32
    %8 = vector.broadcast %cst_8 : f32 to vector<8x256xf32>
    %9 = arith.addf %7, %8 : vector<8x256xf32>
    %cst_9 = arith.constant 0.000000e+00 : f32
    %cst_10 = arith.constant 6.000000e+00 : f32
    %10 = vector.broadcast %cst_9 : f32 to vector<8x256xf32>
    %11 = arith.maximumf %10, %9 : vector<8x256xf32>
    %12 = vector.broadcast %cst_10 : f32 to vector<8x256xf32>
    %13 = arith.minimumf %12, %11 : vector<8x256xf32>
    %cst_11 = arith.constant 0.166666672 : f32
    %14 = vector.broadcast %cst_11 : f32 to vector<8x256xf32>
    %15 = arith.mulf %13, %14 : vector<8x256xf32>
    %16 = arith.mulf %7, %15 : vector<8x256xf32>
    %c0_12 = arith.constant 0 : index
    %c0_13 = arith.constant 0 : index
    %17 = vector.load %arg5[%c0_12, %c0_13] : memref<256x64xf32, #tpu.memory_space<vmem>>, vector<256x64xf32>
    %cst_14 = arith.constant dense<0.000000e+00> : vector<8x64xf32>
    %18 = tpu.matmul %16, %17, %cst_14 {dimension_numbers = #tpu.dot_dimension_numbers<[1], [0], [0], [1], [0, 0, 1, 1], [], []>} : vector<8x256xf32>, vector<256x64xf32>, vector<8x64xf32> -> vector<8x64xf32>
    %c0_15 = arith.constant 0 : index
    %c0_16 = arith.constant 0 : index
    %19 = vector.load %arg6[%c0_15, %c0_16] : memref<1x64xf32, #tpu.memory_space<vmem>>, vector<1x64xf32>
    %20 = vector.broadcast %19 : vector<1x64xf32> to vector<8x64xf32>
    %21 = arith.addf %18, %20 : vector<8x64xf32>
    %22 = arith.negf %21 : vector<8x64xf32>
    %23 = math.exp %22 : vector<8x64xf32>
    %cst_17 = arith.constant 1.000000e+00 : f32
    %24 = vector.broadcast %cst_17 : f32 to vector<8x64xf32>
    %25 = arith.addf %24, %23 : vector<8x64xf32>
    %26 = arith.divf %24, %25 : vector<8x64xf32>
    %c0_18 = arith.constant 0 : index
    %c0_19 = arith.constant 0 : index
    %27 = vector.load %arg7[%c0_18, %c0_19] : memref<256x64xf32, #tpu.memory_space<vmem>>, vector<256x64xf32>
    %cst_20 = arith.constant dense<0.000000e+00> : vector<8x64xf32>
    %28 = tpu.matmul %16, %27, %cst_20 {dimension_numbers = #tpu.dot_dimension_numbers<[1], [0], [0], [1], [0, 0, 1, 1], [], []>} : vector<8x256xf32>, vector<256x64xf32>, vector<8x64xf32> -> vector<8x64xf32>
    %c0_21 = arith.constant 0 : index
    %c0_22 = arith.constant 0 : index
    %29 = vector.load %arg8[%c0_21, %c0_22] : memref<1x64xf32, #tpu.memory_space<vmem>>, vector<1x64xf32>
    %30 = vector.broadcast %29 : vector<1x64xf32> to vector<8x64xf32>
    %31 = arith.addf %28, %30 : vector<8x64xf32>
    %32 = arith.negf %31 : vector<8x64xf32>
    %33 = math.exp %32 : vector<8x64xf32>
    %cst_23 = arith.constant 1.000000e+00 : f32
    %34 = vector.broadcast %cst_23 : f32 to vector<8x64xf32>
    %35 = arith.addf %34, %33 : vector<8x64xf32>
    %36 = arith.divf %34, %35 : vector<8x64xf32>
    %c0_24 = arith.constant 0 : index
    %c0_25 = arith.constant 0 : index
    %37 = vector.load %arg9[%c0_24, %c0_25] : memref<64x1024xf32, #tpu.memory_space<vmem>>, vector<64x1024xf32>
    %cst_26 = arith.constant dense<0.000000e+00> : vector<8x1024xf32>
    %38 = tpu.matmul %26, %37, %cst_26 {dimension_numbers = #tpu.dot_dimension_numbers<[1], [0], [0], [1], [0, 0, 1, 1], [], []>} : vector<8x64xf32>, vector<64x1024xf32>, vector<8x1024xf32> -> vector<8x1024xf32>
    %c0_27 = arith.constant 0 : index
    %c0_28 = arith.constant 0 : index
    %39 = vector.load %arg10[%c0_27, %c0_28] : memref<64x1024xf32, #tpu.memory_space<vmem>>, vector<64x1024xf32>
    %cst_29 = arith.constant dense<0.000000e+00> : vector<8x1024xf32>
    %40 = tpu.matmul %36, %39, %cst_29 {dimension_numbers = #tpu.dot_dimension_numbers<[1], [0], [0], [1], [0, 0, 1, 1], [], []>} : vector<8x64xf32>, vector<64x1024xf32>, vector<8x1024xf32> -> vector<8x1024xf32>
    %41 = arith.mulf %0, %38 : vector<8x1024xf32>
    %42 = arith.mulf %41, %40 : vector<8x1024xf32>
    %c0_30 = arith.constant 0 : index
    %c0_31 = arith.constant 0 : index
    %43 = vector.load %arg11[%c0_30, %c0_31] : memref<8x1024xf32, #tpu.memory_space<vmem>>, vector<8x1024xf32>
    tpu.vector_store %arg11[%c0_30, %c0_31], %42 {strides = array<i32>} : memref<8x1024xf32, #tpu.memory_space<vmem>>, vector<8x1024xf32>,
    return
  }
  func.func @transform_0(%arg0: i32) -> (i32, i32) {
    %c0_i32 = arith.constant 0 : i32
    %c0_i32_0 = arith.constant 0 : i32
    return %arg0, %c0_i32 : i32, i32
  }
  func.func @transform_1(%arg0: i32) -> (i32, i32) {
    %c0_i32 = arith.constant 0 : i32
    %c0_i32_0 = arith.constant 0 : i32
    %c0_i32_1 = arith.constant 0 : i32
    return %c0_i32, %c0_i32_0 : i32, i32
  }
  func.func @transform_2(%arg0: i32) -> (i32, i32) {
    %c0_i32 = arith.constant 0 : i32
    %c0_i32_0 = arith.constant 0 : i32
    %c0_i32_1 = arith.constant 0 : i32
    return %c0_i32, %c0_i32_0 : i32, i32
  }
  func.func @transform_3(%arg0: i32) -> (i32, i32) {
    %c0_i32 = arith.constant 0 : i32
    %c0_i32_0 = arith.constant 0 : i32
    %c0_i32_1 = arith.constant 0 : i32
    return %c0_i32, %c0_i32_0 : i32, i32
  }
  func.func @transform_4(%arg0: i32) -> (i32, i32) {
    %c0_i32 = arith.constant 0 : i32
    %c0_i32_0 = arith.constant 0 : i32
    %c0_i32_1 = arith.constant 0 : i32
    return %c0_i32, %c0_i32_0 : i32, i32
  }
  func.func @transform_5(%arg0: i32) -> (i32, i32) {
    %c0_i32 = arith.constant 0 : i32
    %c0_i32_0 = arith.constant 0 : i32
    %c0_i32_1 = arith.constant 0 : i32
    return %c0_i32, %c0_i32_0 : i32, i32
  }
  func.func @transform_6(%arg0: i32) -> (i32, i32) {
    %c0_i32 = arith.constant 0 : i32
    %c0_i32_0 = arith.constant 0 : i32
    %c0_i32_1 = arith.constant 0 : i32
    return %c0_i32, %c0_i32_0 : i32, i32
  }
  func.func @transform_7(%arg0: i32) -> (i32, i32) {
    %c0_i32 = arith.constant 0 : i32
    %c0_i32_0 = arith.constant 0 : i32
    %c0_i32_1 = arith.constant 0 : i32
    return %c0_i32, %c0_i32_0 : i32, i32
  }
  func.func @transform_8(%arg0: i32) -> (i32, i32) {
    %c0_i32 = arith.constant 0 : i32
    %c0_i32_0 = arith.constant 0 : i32
    %c0_i32_1 = arith.constant 0 : i32
    return %c0_i32, %c0_i32_0 : i32, i32
  }
  func.func @transform_9(%arg0: i32) -> (i32, i32) {
    %c0_i32 = arith.constant 0 : i32
    %c0_i32_0 = arith.constant 0 : i32
    %c0_i32_1 = arith.constant 0 : i32
    return %c0_i32, %c0_i32_0 : i32, i32
  }
  func.func @transform_10(%arg0: i32) -> (i32, i32) {
    %c0_i32 = arith.constant 0 : i32
    %c0_i32_0 = arith.constant 0 : i32
    return %arg0, %c0_i32 : i32, i32
  }
}

</mosaic_0001>

<llo_original>
// kernel: tpu_custom_call.1
$region0: #{tpu_custom_call.1}
  #allocation0 [shape = 'u32[]', space=smem, size = 0x4, offset = 0x4, fixed_abs, tag = 'smem constant byte address 0x4 - core index']
  #allocation1 [shape = 'u32[144,128]{1,0:T(1,128)}', space=vmem, size = 0x12000, scoped, tag = 'internal scratch']
  %s0 = inlined_call_operand.hbm [shape: f32[8,1024], index: 0, kind: input, shape index: {}]
  %s1 = inlined_call_operand.hbm [shape: f32[1024,128], index: 1, kind: input, shape index: {}]
  %s2 = inlined_call_operand.vmem [shape: f32[128,256], index: 2, kind: input, shape index: {}]
  %s3 = inlined_call_operand.vmem [shape: f32[1,256], index: 3, kind: input, shape index: {}]
  %s4 = inlined_call_operand.vmem [shape: f32[256,64], index: 4, kind: input, shape index: {}]
  %s5 = inlined_call_operand.vmem [shape: f32[1,64], index: 5, kind: input, shape index: {}]
  %s6 = inlined_call_operand.vmem [shape: f32[256,64], index: 6, kind: input, shape index: {}]
  %s7 = inlined_call_operand.vmem [shape: f32[1,64], index: 7, kind: input, shape index: {}]
  %s8 = inlined_call_operand.vmem [shape: f32[64,1024], index: 8, kind: input, shape index: {}]
  %s9 = inlined_call_operand.hbm [shape: f32[64,1024], index: 9, kind: input, shape index: {}]
  %s10 = inlined_call_operand.hbm [shape: f32[8,1024], index: 10, kind: output, shape index: {}]
  %s11 = sld [smem:[#allocation0]]
  $region62: #{tpu_custom_call.1} parent=0
    _
  %s13 = ssub.s32 1, %s11
  %s14 = scalar_select 0, %s13, %s11
  $region1: #{tpu_custom_call.1} parent=0
    #allocation2 [shape = 'u8[32768]{0}', space=vmem, size = 0x8000, scoped, tag = 'input window, operand 0, single buffered']
    #allocation3 [shape = 's32[1]{0}', space=sflag, size = 0x4, scoped, tag = 'scoped memory for tpu_custom_call.1']
    #allocation4 [shape = 's32[1]{0}', space=sflag, size = 0x4, scoped, tag = 'scoped memory for tpu_custom_call.1']
    #allocation5 [shape = 'u8[524288]{0}', space=vmem, size = 0x80000, scoped, tag = 'input window, operand 1, single buffered']
    #allocation6 [shape = 's32[1]{0}', space=sflag, size = 0x4, scoped, tag = 'scoped memory for tpu_custom_call.1']
    #allocation7 [shape = 'u8[262144]{0}', space=vmem, size = 0x40000, scoped, tag = 'input window, operand 9, single buffered']
    #allocation8 [shape = 'u8[32768]{0}', space=vmem, size = 0x8000, scoped, tag = 'output window, operand 0, single buffered']
    %15 = vsyncpa [#allocation3], 0
    %16 = vsyncpa [#allocation6], 0
    %17 = vsyncpa [#allocation4], 0
    // Predicated region
    $region2: #{tpu_custom_call.1} parent=1 // pred_check
      _
    $region3: #{tpu_custom_call.1} parent=1 // pred_check_branch
      %19 = sbr.rel (0) target = $region5
    $region4: #{tpu_custom_call.1} parent=1 // pred_region
      %s21 = ssub.s32 1024, 1024
      %22 = vsyncadd [#allocation3], %s21
      %s24 = sshll.u32 [#allocation2], 4
      %s25 = int_to_ptr.vmem [resolvable:$true] %s24
      %27 = dma.hbm_to_vmem [thread:$0]  %s0, 1024, %s25, [#allocation3]
    $region5: #{tpu_custom_call.1} parent=1 // pred_fallthru
      _
    // Predicated region
    $region6: #{tpu_custom_call.1} parent=1 // pred_check
      _
    $region7: #{tpu_custom_call.1} parent=1 // pred_check_branch
      %29 = sbr.rel (0) target = $region9
    $region8: #{tpu_custom_call.1} parent=1 // pred_region
      %s31 = ssub.s32 16384, 16384
      %32 = vsyncadd [#allocation6], %s31
      %s33 = sshll.u32 [#allocation5], 4
      %s34 = int_to_ptr.vmem [resolvable:$true] %s33
      %39 = dma.hbm_to_vmem [thread:$0]  %s1, 16384, %s34, [#allocation6], 128, 128, 8
    $region9: #{tpu_custom_call.1} parent=1 // pred_fallthru
      _
    // Predicated region
    $region10: #{tpu_custom_call.1} parent=1 // pred_check
      _
    $region11: #{tpu_custom_call.1} parent=1 // pred_check_branch
      %41 = sbr.rel (0) target = $region13
    $region12: #{tpu_custom_call.1} parent=1 // pred_region
      _
    $region13: #{tpu_custom_call.1} parent=1 // pred_fallthru
      _
    // Predicated region
    $region14: #{tpu_custom_call.1} parent=1 // pred_check
      _
    $region15: #{tpu_custom_call.1} parent=1 // pred_check_branch
      %43 = sbr.rel (0) target = $region17
    $region16: #{tpu_custom_call.1} parent=1 // pred_region
      _
    $region17: #{tpu_custom_call.1} parent=1 // pred_fallthru
      _
    // Predicated region
    $region18: #{tpu_custom_call.1} parent=1 // pred_check
      _
    $region19: #{tpu_custom_call.1} parent=1 // pred_check_branch
      %45 = sbr.rel (0) target = $region21
    $region20: #{tpu_custom_call.1} parent=1 // pred_region
      _
    $region21: #{tpu_custom_call.1} parent=1 // pred_fallthru
      _
    // Predicated region
    $region22: #{tpu_custom_call.1} parent=1 // pred_check
      _
    $region23: #{tpu_custom_call.1} parent=1 // pred_check_branch
      %47 = sbr.rel (0) target = $region25
    $region24: #{tpu_custom_call.1} parent=1 // pred_region
      _
    $region25: #{tpu_custom_call.1} parent=1 // pred_fallthru
      _
    // Predicated region
    $region26: #{tpu_custom_call.1} parent=1 // pred_check
      _
    $region27: #{tpu_custom_call.1} parent=1 // pred_check_branch
      %49 = sbr.rel (0) target = $region29
    $region28: #{tpu_custom_call.1} parent=1 // pred_region
      _
    $region29: #{tpu_custom_call.1} parent=1 // pred_fallthru
      _
    // Predicated region
    $region30: #{tpu_custom_call.1} parent=1 // pred_check
      _
    $region31: #{tpu_custom_call.1} parent=1 // pred_check_branch
      %51 = sbr.rel (0) target = $region33
    $region32: #{tpu_custom_call.1} parent=1 // pred_region
      _
    $region33: #{tpu_custom_call.1} parent=1 // pred_fallthru
      _
    // Predicated region
    $region34: #{tpu_custom_call.1} parent=1 // pred_check
      _
    $region35: #{tpu_custom_call.1} parent=1 // pred_check_branch
      %53 = sbr.rel (0) target = $region37
    $region36: #{tpu_custom_call.1} parent=1 // pred_region
      _
    $region37: #{tpu_custom_call.1} parent=1 // pred_fallthru
      _
    // Predicated region
    $region38: #{tpu_custom_call.1} parent=1 // pred_check
      _
    $region39: #{tpu_custom_call.1} parent=1 // pred_check_branch
      %55 = sbr.rel (0) target = $region41
    $region40: #{tpu_custom_call.1} parent=1 // pred_region
      %s57 = ssub.s32 8192, 8192
      %58 = vsyncadd [#allocation6], %s57
      %s59 = sshll.u32 [#allocation7], 4
      %s60 = int_to_ptr.vmem [resolvable:$true] %s59
      %65 = dma.hbm_to_vmem [thread:$0]  %s9, 8192, %s60, [#allocation6], 1024, 1024, 64
    $region41: #{tpu_custom_call.1} parent=1 // pred_fallthru
      _
    // Predicated region
    $region42: #{tpu_custom_call.1} parent=1 // pred_check
      _
    $region43: #{tpu_custom_call.1} parent=1 // pred_check_branch
      %67 = sbr.rel (0) target = $region45
    $region44: #{tpu_custom_call.1} parent=1 // pred_region
      %68 = dma.done [#allocation3], 1024
    $region45: #{tpu_custom_call.1} parent=1 // pred_fallthru
      _
    // Predicated region
    $region46: #{tpu_custom_call.1} parent=1 // pred_check
      _
    $region47: #{tpu_custom_call.1} parent=1 // pred_check_branch
      %70 = sbr.rel (0) target = $region49
    $region48: #{tpu_custom_call.1} parent=1 // pred_region
      %71 = dma.done [#allocation6], 16384
    $region49: #{tpu_custom_call.1} parent=1 // pred_fallthru
      _
    // Predicated region
    $region50: #{tpu_custom_call.1} parent=1 // pred_check
      _
    $region51: #{tpu_custom_call.1} parent=1 // pred_check_branch
      %73 = sbr.rel (0) target = $region53
    $region52: #{tpu_custom_call.1} parent=1 // pred_region
      %74 = dma.done [#allocation6], 8192
    $region53: #{tpu_custom_call.1} parent=1 // pred_fallthru
      _
    %v75 = vld [vmem:[#allocation2] sm:$0xff]
    %v76 = vld [vmem:[#allocation2 + $0x8] sm:$0xff]
    %v77 = vld [vmem:[#allocation2 + $0x10] sm:$0xff]
    %v78 = vld [vmem:[#allocation2 + $0x18] sm:$0xff]
    %v79 = vld [vmem:[#allocation2 + $0x20] sm:$0xff]
    %v80 = vld [vmem:[#allocation2 + $0x28] sm:$0xff]
    %v81 = vld [vmem:[#allocation2 + $0x30] sm:$0xff]
    %v82 = vld [vmem:[#allocation2 + $0x38] sm:$0xff]
    %v83 = vld [vmem:[#allocation5] sm:$0xff]
    %v84 = vld [vmem:[#allocation5 + $0x8] sm:$0xff]
    %v85 = vld [vmem:[#allocation5 + $0x10] sm:$0xff]
    %v86 = vld [vmem:[#allocation5 + $0x18] sm:$0xff]
    %v87 = vld [vmem:[#allocation5 + $0x20] sm:$0xff]
    %v88 = vld [vmem:[#allocation5 + $0x28] sm:$0xff]
    %v89 = vld [vmem:[#allocation5 + $0x30] sm:$0xff]
    %v90 = vld [vmem:[#allocation5 + $0x38] sm:$0xff]
    %v91 = vld [vmem:[#allocation5 + $0x40] sm:$0xff]
    %v92 = vld [vmem:[#allocation5 + $0x48] sm:$0xff]
    %v93 = vld [vmem:[#allocation5 + $0x50] sm:$0xff]
    %v94 = vld [vmem:[#allocation5 + $0x58] sm:$0xff]
    %v95 = vld [vmem:[#allocation5 + $0x60] sm:$0xff]
    %v96 = vld [vmem:[#allocation5 + $0x68] sm:$0xff]
    %v97 = vld [vmem:[#allocation5 + $0x70] sm:$0xff]
    %v98 = vld [vmem:[#allocation5 + $0x78] sm:$0xff]
    %v99 = vld [vmem:[#allocation5 + $0x80] sm:$0xff]
    %v100 = vld [vmem:[#allocation5 + $0x88] sm:$0xff]
    %v101 = vld [vmem:[#allocation5 + $0x90] sm:$0xff]
    %v102 = vld [vmem:[#allocation5 + $0x98] sm:$0xff]
    %v103 = vld [vmem:[#allocation5 + $0xa0] sm:$0xff]
    %v104 = vld [vmem:[#allocation5 + $0xa8] sm:$0xff]
    %v105 = vld [vmem:[#allocation5 + $0xb0] sm:$0xff]
    %v106 = vld [vmem:[#allocation5 + $0xb8] sm:$0xff]
    %v107 = vld [vmem:[#allocation5 + $0xc0] sm:$0xff]
    %v108 = vld [vmem:[#allocation5 + $0xc8] sm:$0xff]
    %v109 = vld [vmem:[#allocation5 + $0xd0] sm:$0xff]
    %v110 = vld [vmem:[#allocation5 + $0xd8] sm:$0xff]
    %v111 = vld [vmem:[#allocation5 + $0xe0] sm:$0xff]
    %v112 = vld [vmem:[#allocation5 + $0xe8] sm:$0xff]
    %v113 = vld [vmem:[#allocation5 + $0xf0] sm:$0xff]
    %v114 = vld [vmem:[#allocation5 + $0xf8] sm:$0xff]
    %v115 = vld [vmem:[#allocation5 + $0x100] sm:$0xff]
    %v116 = vld [vmem:[#allocation5 + $0x108] sm:$0xff]
    %v117 = vld [vmem:[#allocation5 + $0x110] sm:$0xff]
    %v118 = vld [vmem:[#allocation5 + $0x118] sm:$0xff]
    %v119 = vld [vmem:[#allocation5 + $0x120] sm:$0xff]
    %v120 = vld [vmem:[#allocation5 + $0x128] sm:$0xff]
    %v121 = vld [vmem:[#allocation5 + $0x130] sm:$0xff]
    %v122 = vld [vmem:[#allocation5 + $0x138] sm:$0xff]
    %v123 = vld [vmem:[#allocation5 + $0x140] sm:$0xff]
    %v124 = vld [vmem:[#allocation5 + $0x148] sm:$0xff]
    %v125 = vld [vmem:[#allocation5 + $0x150] sm:$0xff]
    %v126 = vld [vmem:[#allocation5 + $0x158] sm:$0xff]
    %v127 = vld [vmem:[#allocation5 + $0x160] sm:$0xff]
    %v128 = vld [vmem:[#allocation5 + $0x168] sm:$0xff]
    %v129 = vld [vmem:[#allocation5 + $0x170] sm:$0xff]
    %v130 = vld [vmem:[#allocation5 + $0x178] sm:$0xff]
    %v131 = vld [vmem:[#allocation5 + $0x180] sm:$0xff]
    %v132 = vld [vmem:[#allocation5 + $0x188] sm:$0xff]
    %v133 = vld [vmem:[#allocation5 + $0x190] sm:$0xff]
    %v134 = vld [vmem:[#allocation5 + $0x198] sm:$0xff]
    %v135 = vld [vmem:[#allocation5 + $0x1a0] sm:$0xff]
    %v136 = vld [vmem:[#allocation5 + $0x1a8] sm:$0xff]
    %v137 = vld [vmem:[#allocation5 + $0x1b0] sm:$0xff]
    %v138 = vld [vmem:[#allocation5 + $0x1b8] sm:$0xff]
    %v139 = vld [vmem:[#allocation5 + $0x1c0] sm:$0xff]
    %v140 = vld [vmem:[#allocation5 + $0x1c8] sm:$0xff]
    %v141 = vld [vmem:[#allocation5 + $0x1d0] sm:$0xff]
    %v142 = vld [vmem:[#allocation5 + $0x1d8] sm:$0xff]
    %v143 = vld [vmem:[#allocation5 + $0x1e0] sm:$0xff]
    %v144 = vld [vmem:[#allocation5 + $0x1e8] sm:$0xff]
    %v145 = vld [vmem:[#allocation5 + $0x1f0] sm:$0xff]
    %v146 = vld [vmem:[#allocation5 + $0x1f8] sm:$0xff]
    %v147 = vld [vmem:[#allocation5 + $0x200] sm:$0xff]
    %v148 = vld [vmem:[#allocation5 + $0x208] sm:$0xff]
    %v149 = vld [vmem:[#allocation5 + $0x210] sm:$0xff]
    %v150 = vld [vmem:[#allocation5 + $0x218] sm:$0xff]
    %v151 = vld [vmem:[#allocation5 + $0x220] sm:$0xff]
    %v152 = vld [vmem:[#allocation5 + $0x228] sm:$0xff]
    %v153 = vld [vmem:[#allocation5 + $0x230] sm:$0xff]
    %v154 = vld [vmem:[#allocation5 + $0x238] sm:$0xff]
    %v155 = vld [vmem:[#allocation5 + $0x240] sm:$0xff]
    %v156 = vld [vmem:[#allocation5 + $0x248] sm:$0xff]
    %v157 = vld [vmem:[#allocation5 + $0x250] sm:$0xff]
    %v158 = vld [vmem:[#allocation5 + $0x258] sm:$0xff]
    %v159 = vld [vmem:[#allocation5 + $0x260] sm:$0xff]
    %v160 = vld [vmem:[#allocation5 + $0x268] sm:$0xff]
    %v161 = vld [vmem:[#allocation5 + $0x270] sm:$0xff]
    %v162 = vld [vmem:[#allocation5 + $0x278] sm:$0xff]
    %v163 = vld [vmem:[#allocation5 + $0x280] sm:$0xff]
    %v164 = vld [vmem:[#allocation5 + $0x288] sm:$0xff]
    %v165 = vld [vmem:[#allocation5 + $0x290] sm:$0xff]
    %v166 = vld [vmem:[#allocation5 + $0x298] sm:$0xff]
    %v167 = vld [vmem:[#allocation5 + $0x2a0] sm:$0xff]
    %v168 = vld [vmem:[#allocation5 + $0x2a8] sm:$0xff]
    %v169 = vld [vmem:[#allocation5 + $0x2b0] sm:$0xff]
    %v170 = vld [vmem:[#allocation5 + $0x2b8] sm:$0xff]
    %v171 = vld [vmem:[#allocation5 + $0x2c0] sm:$0xff]
    %v172 = vld [vmem:[#allocation5 + $0x2c8] sm:$0xff]
    %v173 = vld [vmem:[#allocation5 + $0x2d0] sm:$0xff]
    %v174 = vld [vmem:[#allocation5 + $0x2d8] sm:$0xff]
    %v175 = vld [vmem:[#allocation5 + $0x2e0] sm:$0xff]
    %v176 = vld [vmem:[#allocation5 + $0x2e8] sm:$0xff]
    %v177 = vld [vmem:[#allocation5 + $0x2f0] sm:$0xff]
    %v178 = vld [vmem:[#allocation5 + $0x2f8] sm:$0xff]
    %v179 = vld [vmem:[#allocation5 + $0x300] sm:$0xff]
    %v180 = vld [vmem:[#allocation5 + $0x308] sm:$0xff]
    %v181 = vld [vmem:[#allocation5 + $0x310] sm:$0xff]
    %v182 = vld [vmem:[#allocation5 + $0x318] sm:$0xff]
    %v183 = vld [vmem:[#allocation5 + $0x320] sm:$0xff]
    %v184 = vld [vmem:[#allocation5 + $0x328] sm:$0xff]
    %v185 = vld [vmem:[#allocation5 + $0x330] sm:$0xff]
    %v186 = vld [vmem:[#allocation5 + $0x338] sm:$0xff]
    %v187 = vld [vmem:[#allocation5 + $0x340] sm:$0xff]
    %v188 = vld [vmem:[#allocation5 + $0x348] sm:$0xff]
    %v189 = vld [vmem:[#allocation5 + $0x350] sm:$0xff]
    %v190 = vld [vmem:[#allocation5 + $0x358] sm:$0xff]
    %v191 = vld [vmem:[#allocation5 + $0x360] sm:$0xff]
    %v192 = vld [vmem:[#allocation5 + $0x368] sm:$0xff]
    %v193 = vld [vmem:[#allocation5 + $0x370] sm:$0xff]
    %v194 = vld [vmem:[#allocation5 + $0x378] sm:$0xff]
    %v195 = vld [vmem:[#allocation5 + $0x380] sm:$0xff]
    %v196 = vld [vmem:[#allocation5 + $0x388] sm:$0xff]
    %v197 = vld [vmem:[#allocation5 + $0x390] sm:$0xff]
    %v198 = vld [vmem:[#allocation5 + $0x398] sm:$0xff]
    %v199 = vld [vmem:[#allocation5 + $0x3a0] sm:$0xff]
    %v200 = vld [vmem:[#allocation5 + $0x3a8] sm:$0xff]
    %v201 = vld [vmem:[#allocation5 + $0x3b0] sm:$0xff]
    %v202 = vld [vmem:[#allocation5 + $0x3b8] sm:$0xff]
    %v203 = vld [vmem:[#allocation5 + $0x3c0] sm:$0xff]
    %v204 = vld [vmem:[#allocation5 + $0x3c8] sm:$0xff]
    %v205 = vld [vmem:[#allocation5 + $0x3d0] sm:$0xff]
    %v206 = vld [vmem:[#allocation5 + $0x3d8] sm:$0xff]
    %v207 = vld [vmem:[#allocation5 + $0x3e0] sm:$0xff]
    %v208 = vld [vmem:[#allocation5 + $0x3e8] sm:$0xff]
    %v209 = vld [vmem:[#allocation5 + $0x3f0] sm:$0xff]
    %v210 = vld [vmem:[#allocation5 + $0x3f8] sm:$0xff]
    %211 = vmatprep.subr.mxu0 0.0
    %212 = vmatpush1.msra.mxu0 %v98
    %213 = vmatprep.subr.mxu0 0.0
    %214 = vmatpush1.msra.mxu0 %v97
    %215 = vmatprep.subr.mxu0 0.0
    %216 = vmatpush1.msra.mxu0 %v96
    %217 = vmatprep.subr.mxu0 0.0
    %218 = vmatpush1.msra.mxu0 %v95
    %219 = vmatprep.subr.mxu0 0.0
    %220 = vmatpush1.msra.mxu0 %v94
    %221 = vmatprep.subr.mxu0 0.0
    %222 = vmatpush1.msra.mxu0 %v93
    %223 = vmatprep.subr.mxu0 0.0
    %224 = vmatpush1.msra.mxu0 %v92
    %225 = vmatprep.subr.mxu0 0.0
    %226 = vmatpush1.msra.mxu0 %v91
    %227 = vmatprep.subr.mxu0 0.0
    %228 = vmatpush1.msra.mxu0 %v90
    %229 = vmatprep.subr.mxu0 0.0
    %230 = vmatpush1.msra.mxu0 %v89
    %231 = vmatprep.subr.mxu0 0.0
    %232 = vmatpush1.msra.mxu0 %v88
    %233 = vmatprep.subr.mxu0 0.0
    %234 = vmatpush1.msra.mxu0 %v87
    %235 = vmatprep.subr.mxu0 0.0
    %236 = vmatpush1.msra.mxu0 %v86
    %237 = vmatprep.subr.mxu0 0.0
    %238 = vmatpush1.msra.mxu0 %v85
    %239 = vmatprep.subr.mxu0 0.0
    %240 = vmatpush1.msra.mxu0 %v84
    %241 = vmatprep.subr.mxu0 0.0
    %242 = vmatpush1.msra.mxu0 %v83
    %243 = vmatprep.subr.mxu0 0.0
    %244 = vmatpush2.msra.mxu0 %v114
    %245 = vmatprep.subr.mxu0 0.0
    %246 = vmatpush2.msra.mxu0 %v113
    %247 = vmatprep.subr.mxu0 0.0
    %248 = vmatpush2.msra.mxu0 %v112
    %249 = vmatprep.subr.mxu0 0.0
    %250 = vmatpush2.msra.mxu0 %v111
    %251 = vmatprep.subr.mxu0 0.0
    %252 = vmatpush2.msra.mxu0 %v110
    %253 = vmatprep.subr.mxu0 0.0
    %254 = vmatpush2.msra.mxu0 %v109
    %255 = vmatprep.subr.mxu0 0.0
    %256 = vmatpush2.msra.mxu0 %v108
    %257 = vmatprep.subr.mxu0 0.0
    %258 = vmatpush2.msra.mxu0 %v107
    %259 = vmatprep.subr.mxu0 0.0
    %260 = vmatpush2.msra.mxu0 %v106
    %261 = vmatprep.subr.mxu0 0.0
    %262 = vmatpush2.msra.mxu0 %v105
    %263 = vmatprep.subr.mxu0 0.0
    %264 = vmatpush2.msra.mxu0 %v104
    %265 = vmatprep.subr.mxu0 0.0
    %266 = vmatpush2.msra.mxu0 %v103
    %267 = vmatprep.subr.mxu0 0.0
    %268 = vmatpush2.msra.mxu0 %v102
    %269 = vmatprep.subr.mxu0 0.0
    %270 = vmatpush2.msra.mxu0 %v101
    %271 = vmatprep.subr.mxu0 0.0
    %272 = vmatpush2.msra.mxu0 %v100
    %273 = vmatprep.subr.mxu0 0.0
    %274 = vmatpush2.msra.mxu0 %v99
    %275 = vmatprep.mubr.f32.mxu0 %v76
    %276 = vmatmul.mubr.f32.gmra.mxu0 %v75
    %v277 = vpop.f32.mrf.mxu0
    %v278 = vadd.f32 0.0, %v277
    %v279 = vpop.f32.mrf.mxu0
    %280 = vdwg.mxu0
    %281 = vmatprep.subr.mxu0 0.0
    %282 = vmatpush1.msra.mxu0 %v130
    %283 = vmatprep.subr.mxu0 0.0
    %284 = vmatpush1.msra.mxu0 %v129
    %285 = vmatprep.subr.mxu0 0.0
    %286 = vmatpush1.msra.mxu0 %v128
    %287 = vmatprep.subr.mxu0 0.0
    %288 = vmatpush1.msra.mxu0 %v127
    %289 = vmatprep.subr.mxu0 0.0
    %290 = vmatpush1.msra.mxu0 %v126
    %291 = vmatprep.subr.mxu0 0.0
    %292 = vmatpush1.msra.mxu0 %v125
    %293 = vmatprep.subr.mxu0 0.0
    %294 = vmatpush1.msra.mxu0 %v124
    %295 = vmatprep.subr.mxu0 0.0
    %296 = vmatpush1.msra.mxu0 %v123
    %297 = vmatprep.subr.mxu0 0.0
    %298 = vmatpush1.msra.mxu0 %v122
    %299 = vmatprep.subr.mxu0 0.0
    %300 = vmatpush1.msra.mxu0 %v121
    %301 = vmatprep.subr.mxu0 0.0
    %302 = vmatpush1.msra.mxu0 %v120
    %303 = vmatprep.subr.mxu0 0.0
    %304 = vmatpush1.msra.mxu0 %v119
    %305 = vmatprep.subr.mxu0 0.0
    %306 = vmatpush1.msra.mxu0 %v118
    %307 = vmatprep.subr.mxu0 0.0
    %308 = vmatpush1.msra.mxu0 %v117
    %309 = vmatprep.subr.mxu0 0.0
    %310 = vmatpush1.msra.mxu0 %v116
    %311 = vmatprep.subr.mxu0 0.0
    %312 = vmatpush1.msra.mxu0 %v115
    %313 = vmatprep.subr.mxu0 0.0
    %314 = vmatpush2.msra.mxu0 %v146
    %315 = vmatprep.subr.mxu0 0.0
    %316 = vmatpush2.msra.mxu0 %v145
    %317 = vmatprep.subr.mxu0 0.0
    %318 = vmatpush2.msra.mxu0 %v144
    %319 = vmatprep.subr.mxu0 0.0
    %320 = vmatpush2.msra.mxu0 %v143
    %321 = vmatprep.subr.mxu0 0.0
    %322 = vmatpush2.msra.mxu0 %v142
    %323 = vmatprep.subr.mxu0 0.0
    %324 = vmatpush2.msra.mxu0 %v141
    %325 = vmatprep.subr.mxu0 0.0
    %326 = vmatpush2.msra.mxu0 %v140
    %327 = vmatprep.subr.mxu0 0.0
    %328 = vmatpush2.msra.mxu0 %v139
    %329 = vmatprep.subr.mxu0 0.0
    %330 = vmatpush2.msra.mxu0 %v138
    %331 = vmatprep.subr.mxu0 0.0
    %332 = vmatpush2.msra.mxu0 %v137
    %333 = vmatprep.subr.mxu0 0.0
    %334 = vmatpush2.msra.mxu0 %v136
    %335 = vmatprep.subr.mxu0 0.0
    %336 = vmatpush2.msra.mxu0 %v135
    %337 = vmatprep.subr.mxu0 0.0
    %338 = vmatpush2.msra.mxu0 %v134
    %339 = vmatprep.subr.mxu0 0.0
    %340 = vmatpush2.msra.mxu0 %v133
    %341 = vmatprep.subr.mxu0 0.0
    %342 = vmatpush2.msra.mxu0 %v132
    %343 = vmatprep.subr.mxu0 0.0
    %344 = vmatpush2.msra.mxu0 %v131
    %345 = vmatprep.mubr.f32.mxu0 %v78
    %346 = vmatmul.mubr.f32.gmra.mxu0 %v77
    %v347 = vpop.f32.mrf.mxu0
    %v348 = vadd.f32 %v278, %v347
    %v349 = vpop.f32.mrf.mxu0
    %350 = vdwg.mxu0
    %351 = vmatprep.subr.mxu0 0.0
    %352 = vmatpush1.msra.mxu0 %v162
    %353 = vmatprep.subr.mxu0 0.0
    %354 = vmatpush1.msra.mxu0 %v161
    %355 = vmatprep.subr.mxu0 0.0
    %356 = vmatpush1.msra.mxu0 %v160
    %357 = vmatprep.subr.mxu0 0.0
    %358 = vmatpush1.msra.mxu0 %v159
    %359 = vmatprep.subr.mxu0 0.0
    %360 = vmatpush1.msra.mxu0 %v158
    %361 = vmatprep.subr.mxu0 0.0
    %362 = vmatpush1.msra.mxu0 %v157
    %363 = vmatprep.subr.mxu0 0.0
    %364 = vmatpush1.msra.mxu0 %v156
    %365 = vmatprep.subr.mxu0 0.0
    %366 = vmatpush1.msra.mxu0 %v155
    %367 = vmatprep.subr.mxu0 0.0
    %368 = vmatpush1.msra.mxu0 %v154
    %369 = vmatprep.subr.mxu0 0.0
    %370 = vmatpush1.msra.mxu0 %v153
    %371 = vmatprep.subr.mxu0 0.0
    %372 = vmatpush1.msra.mxu0 %v152
    %373 = vmatprep.subr.mxu0 0.0
    %374 = vmatpush1.msra.mxu0 %v151
    %375 = vmatprep.subr.mxu0 0.0
    %376 = vmatpush1.msra.mxu0 %v150
    %377 = vmatprep.subr.mxu0 0.0
    %378 = vmatpush1.msra.mxu0 %v149
    %379 = vmatprep.subr.mxu0 0.0
    %380 = vmatpush1.msra.mxu0 %v148
    %381 = vmatprep.subr.mxu0 0.0
    %382 = vmatpush1.msra.mxu0 %v147
    %383 = vmatprep.subr.mxu0 0.0
    %384 = vmatpush2.msra.mxu0 %v178
    %385 = vmatprep.subr.mxu0 0.0
    %386 = vmatpush2.msra.mxu0 %v177
    %387 = vmatprep.subr.mxu0 0.0
    %388 = vmatpush2.msra.mxu0 %v176
    %389 = vmatprep.subr.mxu0 0.0
    %390 = vmatpush2.msra.mxu0 %v175
    %391 = vmatprep.subr.mxu0 0.0
    %392 = vmatpush2.msra.mxu0 %v174
    %393 = vmatprep.subr.mxu0 0.0
    %394 = vmatpush2.msra.mxu0 %v173
    %395 = vmatprep.subr.mxu0 0.0
    %396 = vmatpush2.msra.mxu0 %v172
    %397 = vmatprep.subr.mxu0 0.0
    %398 = vmatpush2.msra.mxu0 %v171
    %399 = vmatprep.subr.mxu0 0.0
    %400 = vmatpush2.msra.mxu0 %v170
    %401 = vmatprep.subr.mxu0 0.0
    %402 = vmatpush2.msra.mxu0 %v169
    %403 = vmatprep.subr.mxu0 0.0
    %404 = vmatpush2.msra.mxu0 %v168
    %405 = vmatprep.subr.mxu0 0.0
    %406 = vmatpush2.msra.mxu0 %v167
    %407 = vmatprep.subr.mxu0 0.0
    %408 = vmatpush2.msra.mxu0 %v166
    %409 = vmatprep.subr.mxu0 0.0
    %410 = vmatpush2.msra.mxu0 %v165
    %411 = vmatprep.subr.mxu0 0.0
    %412 = vmatpush2.msra.mxu0 %v164
    %413 = vmatprep.subr.mxu0 0.0
    %414 = vmatpush2.msra.mxu0 %v163
    %415 = vmatprep.mubr.f32.mxu0 %v80
    %416 = vmatmul.mubr.f32.gmra.mxu0 %v79
    %v417 = vpop.f32.mrf.mxu0
    %v418 = vadd.f32 %v348, %v417
    %v419 = vpop.f32.mrf.mxu0
    %420 = vdwg.mxu0
    %421 = vmatprep.subr.mxu0 0.0
    %422 = vmatpush1.msra.mxu0 %v194
    %423 = vmatprep.subr.mxu0 0.0
    %424 = vmatpush1.msra.mxu0 %v193
    %425 = vmatprep.subr.mxu0 0.0
    %426 = vmatpush1.msra.mxu0 %v192
    %427 = vmatprep.subr.mxu0 0.0
    %428 = vmatpush1.msra.mxu0 %v191
    %429 = vmatprep.subr.mxu0 0.0
    %430 = vmatpush1.msra.mxu0 %v190
    %431 = vmatprep.subr.mxu0 0.0
    %432 = vmatpush1.msra.mxu0 %v189
    %433 = vmatprep.subr.mxu0 0.0
    %434 = vmatpush1.msra.mxu0 %v188
    %435 = vmatprep.subr.mxu0 0.0
    %436 = vmatpush1.msra.mxu0 %v187
    %437 = vmatprep.subr.mxu0 0.0
    %438 = vmatpush1.msra.mxu0 %v186
    %439 = vmatprep.subr.mxu0 0.0
    %440 = vmatpush1.msra.mxu0 %v185
    %441 = vmatprep.subr.mxu0 0.0
    %442 = vmatpush1.msra.mxu0 %v184
    %443 = vmatprep.subr.mxu0 0.0
    %444 = vmatpush1.msra.mxu0 %v183
    %445 = vmatprep.subr.mxu0 0.0
    %446 = vmatpush1.msra.mxu0 %v182
    %447 = vmatprep.subr.mxu0 0.0
    %448 = vmatpush1.msra.mxu0 %v181
    %449 = vmatprep.subr.mxu0 0.0
    %450 = vmatpush1.msra.mxu0 %v180
    %451 = vmatprep.subr.mxu0 0.0
    %452 = vmatpush1.msra.mxu0 %v179
    %453 = vmatprep.subr.mxu0 0.0
    %454 = vmatpush2.msra.mxu0 %v210
    %455 = vmatprep.subr.mxu0 0.0
    %456 = vmatpush2.msra.mxu0 %v209
    %457 = vmatprep.subr.mxu0 0.0
    %458 = vmatpush2.msra.mxu0 %v208
    %459 = vmatprep.subr.mxu0 0.0
    %460 = vmatpush2.msra.mxu0 %v207
    %461 = vmatprep.subr.mxu0 0.0
    %462 = vmatpush2.msra.mxu0 %v206
    %463 = vmatprep.subr.mxu0 0.0
    %464 = vmatpush2.msra.mxu0 %v205
    %465 = vmatprep.subr.mxu0 0.0
    %466 = vmatpush2.msra.mxu0 %v204
    %467 = vmatprep.subr.mxu0 0.0
    %468 = vmatpush2.msra.mxu0 %v203
    %469 = vmatprep.subr.mxu0 0.0
    %470 = vmatpush2.msra.mxu0 %v202
    %471 = vmatprep.subr.mxu0 0.0
    %472 = vmatpush2.msra.mxu0 %v201
    %473 = vmatprep.subr.mxu0 0.0
    %474 = vmatpush2.msra.mxu0 %v200
    %475 = vmatprep.subr.mxu0 0.0
    %476 = vmatpush2.msra.mxu0 %v199
    %477 = vmatprep.subr.mxu0 0.0
    %478 = vmatpush2.msra.mxu0 %v198
    %479 = vmatprep.subr.mxu0 0.0
    %480 = vmatpush2.msra.mxu0 %v197
    %481 = vmatprep.subr.mxu0 0.0
    %482 = vmatpush2.msra.mxu0 %v196
    %483 = vmatprep.subr.mxu0 0.0
    %484 = vmatpush2.msra.mxu0 %v195
    %485 = vmatprep.mubr.f32.mxu0 %v82
    %486 = vmatmul.mubr.f32.gmra.mxu0 %v81
    %v487 = vpop.f32.mrf.mxu0
    %v488 = vadd.f32 %v418, %v487
    %v489 = vpop.f32.mrf.mxu0
    %490 = vdwg.mxu0
    %v491 = vld [vmem:[%s2] sm:$0xff]
    %v492 = vld [vmem:[%s2 + $0x8] sm:$0xff]
    %v493 = vld [vmem:[%s2 + $0x10] sm:$0xff]
    %v494 = vld [vmem:[%s2 + $0x18] sm:$0xff]
    %v495 = vld [vmem:[%s2 + $0x20] sm:$0xff]
    %v496 = vld [vmem:[%s2 + $0x28] sm:$0xff]
    %v497 = vld [vmem:[%s2 + $0x30] sm:$0xff]
    %v498 = vld [vmem:[%s2 + $0x38] sm:$0xff]
    %v499 = vld [vmem:[%s2 + $0x40] sm:$0xff]
    %v500 = vld [vmem:[%s2 + $0x48] sm:$0xff]
    %v501 = vld [vmem:[%s2 + $0x50] sm:$0xff]
    %v502 = vld [vmem:[%s2 + $0x58] sm:$0xff]
    %v503 = vld [vmem:[%s2 + $0x60] sm:$0xff]
    %v504 = vld [vmem:[%s2 + $0x68] sm:$0xff]
    %v505 = vld [vmem:[%s2 + $0x70] sm:$0xff]
    %v506 = vld [vmem:[%s2 + $0x78] sm:$0xff]
    %v507 = vld [vmem:[%s2 + $0x80] sm:$0xff]
    %v508 = vld [vmem:[%s2 + $0x88] sm:$0xff]
    %v509 = vld [vmem:[%s2 + $0x90] sm:$0xff]
    %v510 = vld [vmem:[%s2 + $0x98] sm:$0xff]
    %v511 = vld [vmem:[%s2 + $0xa0] sm:$0xff]
    %v512 = vld [vmem:[%s2 + $0xa8] sm:$0xff]
    %v513 = vld [vmem:[%s2 + $0xb0] sm:$0xff]
    %v514 = vld [vmem:[%s2 + $0xb8] sm:$0xff]
    %v515 = vld [vmem:[%s2 + $0xc0] sm:$0xff]
    %v516 = vld [vmem:[%s2 + $0xc8] sm:$0xff]
    %v517 = vld [vmem:[%s2 + $0xd0] sm:$0xff]
    %v518 = vld [vmem:[%s2 + $0xd8] sm:$0xff]
    %v519 = vld [vmem:[%s2 + $0xe0] sm:$0xff]
    %v520 = vld [vmem:[%s2 + $0xe8] sm:$0xff]
    %v521 = vld [vmem:[%s2 + $0xf0] sm:$0xff]
    %v522 = vld [vmem:[%s2 + $0xf8] sm:$0xff]
    %v523 = vld [vmem:[%s3] sm:$0x3]
    %v525 = vlaneseq
    %v526 = vshrl.u32 %v525, 7
    %v527 = vsub.s32 0, %v526
    %v528 = vrot.slane %v523, %v527
    %v529 = vlaneseq
    %v530 = vshrl.u32 %v529, 7
    %v531 = vsub.s32 1, %v530
    %v532 = vrot.slane %v523, %v531
    %535 = vmatprep.subr.mxu0 %v522
    %536 = vmatpush1.msra.mxu0 %v521
    %537 = vmatprep.subr.mxu0 %v520
    %538 = vmatpush1.msra.mxu0 %v519
    %539 = vmatprep.subr.mxu0 %v518
    %540 = vmatpush1.msra.mxu0 %v517
    %541 = vmatprep.subr.mxu0 %v516
    %542 = vmatpush1.msra.mxu0 %v515
    %543 = vmatprep.subr.mxu0 %v514
    %544 = vmatpush1.msra.mxu0 %v513
    %545 = vmatprep.subr.mxu0 %v512
    %546 = vmatpush1.msra.mxu0 %v511
    %547 = vmatprep.subr.mxu0 %v510
    %548 = vmatpush1.msra.mxu0 %v509
    %549 = vmatprep.subr.mxu0 %v508
    %550 = vmatpush1.msra.mxu0 %v507
    %551 = vmatprep.subr.mxu0 %v506
    %552 = vmatpush1.msra.mxu0 %v505
    %553 = vmatprep.subr.mxu0 %v504
    %554 = vmatpush1.msra.mxu0 %v503
    %555 = vmatprep.subr.mxu0 %v502
    %556 = vmatpush1.msra.mxu0 %v501
    %557 = vmatprep.subr.mxu0 %v500
    %558 = vmatpush1.msra.mxu0 %v499
    %559 = vmatprep.subr.mxu0 %v498
    %560 = vmatpush1.msra.mxu0 %v497
    %561 = vmatprep.subr.mxu0 %v496
    %562 = vmatpush1.msra.mxu0 %v495
    %563 = vmatprep.subr.mxu0 %v494
    %564 = vmatpush1.msra.mxu0 %v493
    %565 = vmatprep.subr.mxu0 %v492
    %566 = vmatpush1.msra.mxu0 %v491
    %567 = vmatprep.subr.mxu0 0.0
    %568 = vmatpush2.msra.mxu0 0.0
    %569 = vmatprep.subr.mxu0 0.0
    %570 = vmatpush2.msra.mxu0 0.0
    %571 = vmatprep.subr.mxu0 0.0
    %572 = vmatpush2.msra.mxu0 0.0
    %573 = vmatprep.subr.mxu0 0.0
    %574 = vmatpush2.msra.mxu0 0.0
    %575 = vmatprep.subr.mxu0 0.0
    %576 = vmatpush2.msra.mxu0 0.0
    %577 = vmatprep.subr.mxu0 0.0
    %578 = vmatpush2.msra.mxu0 0.0
    %579 = vmatprep.subr.mxu0 0.0
    %580 = vmatpush2.msra.mxu0 0.0
    %581 = vmatprep.subr.mxu0 0.0
    %582 = vmatpush2.msra.mxu0 0.0
    %583 = vmatprep.subr.mxu0 0.0
    %584 = vmatpush2.msra.mxu0 0.0
    %585 = vmatprep.subr.mxu0 0.0
    %586 = vmatpush2.msra.mxu0 0.0
    %587 = vmatprep.subr.mxu0 0.0
    %588 = vmatpush2.msra.mxu0 0.0
    %589 = vmatprep.subr.mxu0 0.0
    %590 = vmatpush2.msra.mxu0 0.0
    %591 = vmatprep.subr.mxu0 0.0
    %592 = vmatpush2.msra.mxu0 0.0
    %593 = vmatprep.subr.mxu0 0.0
    %594 = vmatpush2.msra.mxu0 0.0
    %595 = vmatprep.subr.mxu0 0.0
    %596 = vmatpush2.msra.mxu0 0.0
    %597 = vmatprep.subr.mxu0 0.0
    %598 = vmatpush2.msra.mxu0 0.0
    %599 = vmatprep.mubr.f32.mxu0 0.0
    %600 = vmatmul.mubr.f32.gmra.mxu0 %v488
    %v601 = vpop.f32.mrf.mxu0
    %v602 = vadd.f32 %v528, %v601
    %v603 = vpop.f32.mrf.mxu0
    %v604 = vadd.f32 %v532, %v603
    %605 = vdwg.mxu0
    %v606 = vadd.f32 %v602, 3.0
    %v607 = vadd.f32 %v604, 3.0
    %v608 = vmax.f32 %v606, 0.0
    %v609 = vmax.f32 %v607, 0.0
    %v610 = vmin.f32 %v608, 6.0
    %v611 = vmin.f32 %v609, 6.0
    %v612 = vmul.f32 %v610, 0.16666667
    %v613 = vmul.f32 %v611, 0.16666667
    %v614 = vmul.f32 %v602, %v612
    %v615 = vmul.f32 %v604, %v613
    %v616 = vld [vmem:[%s4] sm:$0xff]
    %v617 = vld [vmem:[%s4 + $0x8] sm:$0xff]
    %v618 = vld [vmem:[%s4 + $0x10] sm:$0xff]
    %v619 = vld [vmem:[%s4 + $0x18] sm:$0xff]
    %v620 = vld [vmem:[%s4 + $0x20] sm:$0xff]
    %v621 = vld [vmem:[%s4 + $0x28] sm:$0xff]
    %v622 = vld [vmem:[%s4 + $0x30] sm:$0xff]
    %v623 = vld [vmem:[%s4 + $0x38] sm:$0xff]
    %v624 = vld [vmem:[%s4 + $0x40] sm:$0xff]
    %v625 = vld [vmem:[%s4 + $0x48] sm:$0xff]
    %v626 = vld [vmem:[%s4 + $0x50] sm:$0xff]
    %v627 = vld [vmem:[%s4 + $0x58] sm:$0xff]
    %v628 = vld [vmem:[%s4 + $0x60] sm:$0xff]
    %v629 = vld [vmem:[%s4 + $0x68] sm:$0xff]
    %v630 = vld [vmem:[%s4 + $0x70] sm:$0xff]
    %v631 = vld [vmem:[%s4 + $0x78] sm:$0xff]
    %v632 = vld [vmem:[%s4 + $0x80] sm:$0xff]
    %v633 = vld [vmem:[%s4 + $0x88] sm:$0xff]
    %v634 = vld [vmem:[%s4 + $0x90] sm:$0xff]
    %v635 = vld [vmem:[%s4 + $0x98] sm:$0xff]
    %v636 = vld [vmem:[%s4 + $0xa0] sm:$0xff]
    %v637 = vld [vmem:[%s4 + $0xa8] sm:$0xff]
    %v638 = vld [vmem:[%s4 + $0xb0] sm:$0xff]
    %v639 = vld [vmem:[%s4 + $0xb8] sm:$0xff]
    %v640 = vld [vmem:[%s4 + $0xc0] sm:$0xff]
    %v641 = vld [vmem:[%s4 + $0xc8] sm:$0xff]
    %v642 = vld [vmem:[%s4 + $0xd0] sm:$0xff]
    %v643 = vld [vmem:[%s4 + $0xd8] sm:$0xff]
    %v644 = vld [vmem:[%s4 + $0xe0] sm:$0xff]
    %v645 = vld [vmem:[%s4 + $0xe8] sm:$0xff]
    %v646 = vld [vmem:[%s4 + $0xf0] sm:$0xff]
    %v647 = vld [vmem:[%s4 + $0xf8] sm:$0xff]
    %v648 = vld [vmem:[%s5] sm:$0x1]
    %v650 = vlaneseq
    %v651 = vshrl.u32 %v650, 7
    %v652 = vsub.s32 0, %v651
    %v653 = vrot.slane %v648, %v652
    %655 = vmatprep.subr.mxu0 0.0
    %656 = vmatpush1.msra.mxu0 %v631
    %657 = vmatprep.subr.mxu0 0.0
    %658 = vmatpush1.msra.mxu0 %v630
    %659 = vmatprep.subr.mxu0 0.0
    %660 = vmatpush1.msra.mxu0 %v629
    %661 = vmatprep.subr.mxu0 0.0
    %662 = vmatpush1.msra.mxu0 %v628
    %663 = vmatprep.subr.mxu0 0.0
    %664 = vmatpush1.msra.mxu0 %v627
    %665 = vmatprep.subr.mxu0 0.0
    %666 = vmatpush1.msra.mxu0 %v626
    %667 = vmatprep.subr.mxu0 0.0
    %668 = vmatpush1.msra.mxu0 %v625
    %669 = vmatprep.subr.mxu0 0.0
    %670 = vmatpush1.msra.mxu0 %v624
    %671 = vmatprep.subr.mxu0 0.0
    %672 = vmatpush1.msra.mxu0 %v623
    %673 = vmatprep.subr.mxu0 0.0
    %674 = vmatpush1.msra.mxu0 %v622
    %675 = vmatprep.subr.mxu0 0.0
    %676 = vmatpush1.msra.mxu0 %v621
    %677 = vmatprep.subr.mxu0 0.0
    %678 = vmatpush1.msra.mxu0 %v620
    %679 = vmatprep.subr.mxu0 0.0
    %680 = vmatpush1.msra.mxu0 %v619
    %681 = vmatprep.subr.mxu0 0.0
    %682 = vmatpush1.msra.mxu0 %v618
    %683 = vmatprep.subr.mxu0 0.0
    %684 = vmatpush1.msra.mxu0 %v617
    %685 = vmatprep.subr.mxu0 0.0
    %686 = vmatpush1.msra.mxu0 %v616
    %687 = vmatprep.subr.mxu0 0.0
    %688 = vmatpush2.msra.mxu0 %v647
    %689 = vmatprep.subr.mxu0 0.0
    %690 = vmatpush2.msra.mxu0 %v646
    %691 = vmatprep.subr.mxu0 0.0
    %692 = vmatpush2.msra.mxu0 %v645
    %693 = vmatprep.subr.mxu0 0.0
    %694 = vmatpush2.msra.mxu0 %v644
    %695 = vmatprep.subr.mxu0 0.0
    %696 = vmatpush2.msra.mxu0 %v643
    %697 = vmatprep.subr.mxu0 0.0
    %698 = vmatpush2.msra.mxu0 %v642
    %699 = vmatprep.subr.mxu0 0.0
    %700 = vmatpush2.msra.mxu0 %v641
    %701 = vmatprep.subr.mxu0 0.0
    %702 = vmatpush2.msra.mxu0 %v640
    %703 = vmatprep.subr.mxu0 0.0
    %704 = vmatpush2.msra.mxu0 %v639
    %705 = vmatprep.subr.mxu0 0.0
    %706 = vmatpush2.msra.mxu0 %v638
    %707 = vmatprep.subr.mxu0 0.0
    %708 = vmatpush2.msra.mxu0 %v637
    %709 = vmatprep.subr.mxu0 0.0
    %710 = vmatpush2.msra.mxu0 %v636
    %711 = vmatprep.subr.mxu0 0.0
    %712 = vmatpush2.msra.mxu0 %v635
    %713 = vmatprep.subr.mxu0 0.0
    %714 = vmatpush2.msra.mxu0 %v634
    %715 = vmatprep.subr.mxu0 0.0
    %716 = vmatpush2.msra.mxu0 %v633
    %717 = vmatprep.subr.mxu0 0.0
    %718 = vmatpush2.msra.mxu0 %v632
    %719 = vmatprep.mubr.f32.mxu0 %v615
    %720 = vmatmul.mubr.f32.gmra.mxu0 %v614
    %v721 = vpop.f32.mrf.mxu0
    %v722 = vadd.f32 %v653, %v721
    %v723 = vpop.f32.mrf.mxu0
    %724 = vdwg.mxu0
    %v725 = vxor.u32 %v722, 2147483648
    %v726 = vmul.f32 %v725, 1.442695
    %v727 = vpow.pop %v726
    %v728 = vadd.f32 %v727, 1.0
    %v729 = vrcp.pop %v728
    %v730 = vmul.f32 1.0, %v729
    %v731 = vld [vmem:[%s6] sm:$0xff]
    %v732 = vld [vmem:[%s6 + $0x8] sm:$0xff]
    %v733 = vld [vmem:[%s6 + $0x10] sm:$0xff]
    %v734 = vld [vmem:[%s6 + $0x18] sm:$0xff]
    %v735 = vld [vmem:[%s6 + $0x20] sm:$0xff]
    %v736 = vld [vmem:[%s6 + $0x28] sm:$0xff]
    %v737 = vld [vmem:[%s6 + $0x30] sm:$0xff]
    %v738 = vld [vmem:[%s6 + $0x38] sm:$0xff]
    %v739 = vld [vmem:[%s6 + $0x40] sm:$0xff]
    %v740 = vld [vmem:[%s6 + $0x48] sm:$0xff]
    %v741 = vld [vmem:[%s6 + $0x50] sm:$0xff]
    %v742 = vld [vmem:[%s6 + $0x58] sm:$0xff]
    %v743 = vld [vmem:[%s6 + $0x60] sm:$0xff]
    %v744 = vld [vmem:[%s6 + $0x68] sm:$0xff]
    %v745 = vld [vmem:[%s6 + $0x70] sm:$0xff]
    %v746 = vld [vmem:[%s6 + $0x78] sm:$0xff]
    %v747 = vld [vmem:[%s6 + $0x80] sm:$0xff]
    %v748 = vld [vmem:[%s6 + $0x88] sm:$0xff]
    %v749 = vld [vmem:[%s6 + $0x90] sm:$0xff]
    %v750 = vld [vmem:[%s6 + $0x98] sm:$0xff]
    %v751 = vld [vmem:[%s6 + $0xa0] sm:$0xff]
    %v752 = vld [vmem:[%s6 + $0xa8] sm:$0xff]
    %v753 = vld [vmem:[%s6 + $0xb0] sm:$0xff]
    %v754 = vld [vmem:[%s6 + $0xb8] sm:$0xff]
    %v755 = vld [vmem:[%s6 + $0xc0] sm:$0xff]
    %v756 = vld [vmem:[%s6 + $0xc8] sm:$0xff]
    %v757 = vld [vmem:[%s6 + $0xd0] sm:$0xff]
    %v758 = vld [vmem:[%s6 + $0xd8] sm:$0xff]
    %v759 = vld [vmem:[%s6 + $0xe0] sm:$0xff]
    %v760 = vld [vmem:[%s6 + $0xe8] sm:$0xff]
    %v761 = vld [vmem:[%s6 + $0xf0] sm:$0xff]
    %v762 = vld [vmem:[%s6 + $0xf8] sm:$0xff]
    %v763 = vld [vmem:[%s7] sm:$0x1]
    %v765 = vlaneseq
    %v766 = vshrl.u32 %v765, 7
    %v767 = vsub.s32 0, %v766
    %v768 = vrot.slane %v763, %v767
    %770 = vmatprep.subr.mxu0 0.0
    %771 = vmatpush1.msra.mxu0 %v746
    %772 = vmatprep.subr.mxu0 0.0
    %773 = vmatpush1.msra.mxu0 %v745
    %774 = vmatprep.subr.mxu0 0.0
    %775 = vmatpush1.msra.mxu0 %v744
    %776 = vmatprep.subr.mxu0 0.0
    %777 = vmatpush1.msra.mxu0 %v743
    %778 = vmatprep.subr.mxu0 0.0
    %779 = vmatpush1.msra.mxu0 %v742
    %780 = vmatprep.subr.mxu0 0.0
    %781 = vmatpush1.msra.mxu0 %v741
    %782 = vmatprep.subr.mxu0 0.0
    %783 = vmatpush1.msra.mxu0 %v740
    %784 = vmatprep.subr.mxu0 0.0
    %785 = vmatpush1.msra.mxu0 %v739
    %786 = vmatprep.subr.mxu0 0.0
    %787 = vmatpush1.msra.mxu0 %v738
    %788 = vmatprep.subr.mxu0 0.0
    %789 = vmatpush1.msra.mxu0 %v737
    %790 = vmatprep.subr.mxu0 0.0
    %791 = vmatpush1.msra.mxu0 %v736
    %792 = vmatprep.subr.mxu0 0.0
    %793 = vmatpush1.msra.mxu0 %v735
    %794 = vmatprep.subr.mxu0 0.0
    %795 = vmatpush1.msra.mxu0 %v734
    %796 = vmatprep.subr.mxu0 0.0
    %797 = vmatpush1.msra.mxu0 %v733
    %798 = vmatprep.subr.mxu0 0.0
    %799 = vmatpush1.msra.mxu0 %v732
    %800 = vmatprep.subr.mxu0 0.0
    %801 = vmatpush1.msra.mxu0 %v731
    %802 = vmatprep.subr.mxu0 0.0
    %803 = vmatpush2.msra.mxu0 %v762
    %804 = vmatprep.subr.mxu0 0.0
    %805 = vmatpush2.msra.mxu0 %v761
    %806 = vmatprep.subr.mxu0 0.0
    %807 = vmatpush2.msra.mxu0 %v760
    %808 = vmatprep.subr.mxu0 0.0
    %809 = vmatpush2.msra.mxu0 %v759
    %810 = vmatprep.subr.mxu0 0.0
    %811 = vmatpush2.msra.mxu0 %v758
    %812 = vmatprep.subr.mxu0 0.0
    %813 = vmatpush2.msra.mxu0 %v757
    %814 = vmatprep.subr.mxu0 0.0
    %815 = vmatpush2.msra.mxu0 %v756
    %816 = vmatprep.subr.mxu0 0.0
    %817 = vmatpush2.msra.mxu0 %v755
    %818 = vmatprep.subr.mxu0 0.0
    %819 = vmatpush2.msra.mxu0 %v754
    %820 = vmatprep.subr.mxu0 0.0
    %821 = vmatpush2.msra.mxu0 %v753
    %822 = vmatprep.subr.mxu0 0.0
    %823 = vmatpush2.msra.mxu0 %v752
    %824 = vmatprep.subr.mxu0 0.0
    %825 = vmatpush2.msra.mxu0 %v751
    %826 = vmatprep.subr.mxu0 0.0
    %827 = vmatpush2.msra.mxu0 %v750
    %828 = vmatprep.subr.mxu0 0.0
    %829 = vmatpush2.msra.mxu0 %v749
    %830 = vmatprep.subr.mxu0 0.0
    %831 = vmatpush2.msra.mxu0 %v748
    %832 = vmatprep.subr.mxu0 0.0
    %833 = vmatpush2.msra.mxu0 %v747
    %834 = vmatprep.mubr.f32.mxu0 %v615
    %835 = vmatmul.mubr.f32.gmra.mxu0 %v614
    %v836 = vpop.f32.mrf.mxu0
    %v837 = vadd.f32 %v768, %v836
    %v838 = vpop.f32.mrf.mxu0
    %839 = vdwg.mxu0
    %v840 = vxor.u32 %v837, 2147483648
    %v841 = vmul.f32 %v840, 1.442695
    %v842 = vpow.pop %v841
    %v843 = vadd.f32 %v842, 1.0
    %v844 = vrcp.pop %v843
    %v845 = vmul.f32 1.0, %v844
    %v846 = vld [vmem:[%s8] sm:$0xff]
    %v847 = vld [vmem:[%s8 + $0x8] sm:$0xff]
    %v848 = vld [vmem:[%s8 + $0x10] sm:$0xff]
    %v849 = vld [vmem:[%s8 + $0x18] sm:$0xff]
    %v850 = vld [vmem:[%s8 + $0x20] sm:$0xff]
    %v851 = vld [vmem:[%s8 + $0x28] sm:$0xff]
    %v852 = vld [vmem:[%s8 + $0x30] sm:$0xff]
    %v853 = vld [vmem:[%s8 + $0x38] sm:$0xff]
    %v854 = vld [vmem:[%s8 + $0x40] sm:$0xff]
    %v855 = vld [vmem:[%s8 + $0x48] sm:$0xff]
    %v856 = vld [vmem:[%s8 + $0x50] sm:$0xff]
    %v857 = vld [vmem:[%s8 + $0x58] sm:$0xff]
    %v858 = vld [vmem:[%s8 + $0x60] sm:$0xff]
    %v859 = vld [vmem:[%s8 + $0x68] sm:$0xff]
    %v860 = vld [vmem:[%s8 + $0x70] sm:$0xff]
    %v861 = vld [vmem:[%s8 + $0x78] sm:$0xff]
    %v862 = vld [vmem:[%s8 + $0x80] sm:$0xff]
    %v863 = vld [vmem:[%s8 + $0x88] sm:$0xff]
    %v864 = vld [vmem:[%s8 + $0x90] sm:$0xff]
    %v865 = vld [vmem:[%s8 + $0x98] sm:$0xff]
    %v866 = vld [vmem:[%s8 + $0xa0] sm:$0xff]
    %v867 = vld [vmem:[%s8 + $0xa8] sm:$0xff]
    %v868 = vld [vmem:[%s8 + $0xb0] sm:$0xff]
    %v869 = vld [vmem:[%s8 + $0xb8] sm:$0xff]
    %v870 = vld [vmem:[%s8 + $0xc0] sm:$0xff]
    %v871 = vld [vmem:[%s8 + $0xc8] sm:$0xff]
    %v872 = vld [vmem:[%s8 + $0xd0] sm:$0xff]
    %v873 = vld [vmem:[%s8 + $0xd8] sm:$0xff]
    %v874 = vld [vmem:[%s8 + $0xe0] sm:$0xff]
    %v875 = vld [vmem:[%s8 + $0xe8] sm:$0xff]
    %v876 = vld [vmem:[%s8 + $0xf0] sm:$0xff]
    %v877 = vld [vmem:[%s8 + $0xf8] sm:$0xff]
    %v878 = vld [vmem:[%s8 + $0x100] sm:$0xff]
    %v879 = vld [vmem:[%s8 + $0x108] sm:$0xff]
    %v880 = vld [vmem:[%s8 + $0x110] sm:$0xff]
    %v881 = vld [vmem:[%s8 + $0x118] sm:$0xff]
    %v882 = vld [vmem:[%s8 + $0x120] sm:$0xff]
    %v883 = vld [vmem:[%s8 + $0x128] sm:$0xff]
    %v884 = vld [vmem:[%s8 + $0x130] sm:$0xff]
    %v885 = vld [vmem:[%s8 + $0x138] sm:$0xff]
    %v886 = vld [vmem:[%s8 + $0x140] sm:$0xff]
    %v887 = vld [vmem:[%s8 + $0x148] sm:$0xff]
    %v888 = vld [vmem:[%s8 + $0x150] sm:$0xff]
    %v889 = vld [vmem:[%s8 + $0x158] sm:$0xff]
    %v890 = vld [vmem:[%s8 + $0x160] sm:$0xff]
    %v891 = vld [vmem:[%s8 + $0x168] sm:$0xff]
    %v892 = vld [vmem:[%s8 + $0x170] sm:$0xff]
    %v893 = vld [vmem:[%s8 + $0x178] sm:$0xff]
    %v894 = vld [vmem:[%s8 + $0x180] sm:$0xff]
    %v895 = vld [vmem:[%s8 + $0x188] sm:$0xff]
    %v896 = vld [vmem:[%s8 + $0x190] sm:$0xff]
    %v897 = vld [vmem:[%s8 + $0x198] sm:$0xff]
    %v898 = vld [vmem:[%s8 + $0x1a0] sm:$0xff]
    %v899 = vld [vmem:[%s8 + $0x1a8] sm:$0xff]
    %v900 = vld [vmem:[%s8 + $0x1b0] sm:$0xff]
    %v901 = vld [vmem:[%s8 + $0x1b8] sm:$0xff]
    %v902 = vld [vmem:[%s8 + $0x1c0] sm:$0xff]
    %v903 = vld [vmem:[%s8 + $0x1c8] sm:$0xff]
    %v904 = vld [vmem:[%s8 + $0x1d0] sm:$0xff]
    %v905 = vld [vmem:[%s8 + $0x1d8] sm:$0xff]
    %v906 = vld [vmem:[%s8 + $0x1e0] sm:$0xff]
    %v907 = vld [vmem:[%s8 + $0x1e8] sm:$0xff]
    %v908 = vld [vmem:[%s8 + $0x1f0] sm:$0xff]
    %v909 = vld [vmem:[%s8 + $0x1f8] sm:$0xff]
    %vm910 = vcmask 523264
    %v912 = vsel %vm910, %v730, 0
    %914 = vmatprep.subr.mxu0 0.0
    %915 = vmatpush1.msra.mxu0 0.0
    %916 = vmatprep.subr.mxu0 0.0
    %917 = vmatpush1.msra.mxu0 0.0
    %918 = vmatprep.subr.mxu0 0.0
    %919 = vmatpush1.msra.mxu0 0.0
    %920 = vmatprep.subr.mxu0 0.0
    %921 = vmatpush1.msra.mxu0 0.0
    %922 = vmatprep.subr.mxu0 0.0
    %923 = vmatpush1.msra.mxu0 0.0
    %924 = vmatprep.subr.mxu0 0.0
    %925 = vmatpush1.msra.mxu0 0.0
    %926 = vmatprep.subr.mxu0 0.0
    %927 = vmatpush1.msra.mxu0 0.0
    %928 = vmatprep.subr.mxu0 0.0
    %929 = vmatpush1.msra.mxu0 0.0
    %930 = vmatprep.subr.mxu0 %v903
    %931 = vmatpush1.msra.mxu0 %v902
    %932 = vmatprep.subr.mxu0 %v895
    %933 = vmatpush1.msra.mxu0 %v894
    %934 = vmatprep.subr.mxu0 %v887
    %935 = vmatpush1.msra.mxu0 %v886
    %936 = vmatprep.subr.mxu0 %v879
    %937 = vmatpush1.msra.mxu0 %v878
    %938 = vmatprep.subr.mxu0 %v871
    %939 = vmatpush1.msra.mxu0 %v870
    %940 = vmatprep.subr.mxu0 %v863
    %941 = vmatpush1.msra.mxu0 %v862
    %942 = vmatprep.subr.mxu0 %v855
    %943 = vmatpush1.msra.mxu0 %v854
    %944 = vmatprep.subr.mxu0 %v847
    %945 = vmatpush1.msra.mxu0 %v846
    %946 = vmatprep.subr.mxu0 0.0
    %947 = vmatpush2.msra.mxu0 0.0
    %948 = vmatprep.subr.mxu0 0.0
    %949 = vmatpush2.msra.mxu0 0.0
    %950 = vmatprep.subr.mxu0 0.0
    %951 = vmatpush2.msra.mxu0 0.0
    %952 = vmatprep.subr.mxu0 0.0
    %953 = vmatpush2.msra.mxu0 0.0
    %954 = vmatprep.subr.mxu0 0.0
    %955 = vmatpush2.msra.mxu0 0.0
    %956 = vmatprep.subr.mxu0 0.0
    %957 = vmatpush2.msra.mxu0 0.0
    %958 = vmatprep.subr.mxu0 0.0
    %959 = vmatpush2.msra.mxu0 0.0
    %960 = vmatprep.subr.mxu0 0.0
    %961 = vmatpush2.msra.mxu0 0.0
    %962 = vmatprep.subr.mxu0 0.0
    %963 = vmatpush2.msra.mxu0 0.0
    %964 = vmatprep.subr.mxu0 0.0
    %965 = vmatpush2.msra.mxu0 0.0
    %966 = vmatprep.subr.mxu0 0.0
    %967 = vmatpush2.msra.mxu0 0.0
    %968 = vmatprep.subr.mxu0 0.0
    %969 = vmatpush2.msra.mxu0 0.0
    %970 = vmatprep.subr.mxu0 0.0
    %971 = vmatpush2.msra.mxu0 0.0
    %972 = vmatprep.subr.mxu0 0.0
    %973 = vmatpush2.msra.mxu0 0.0
    %974 = vmatprep.subr.mxu0 0.0
    %975 = vmatpush2.msra.mxu0 0.0
    %976 = vmatprep.subr.mxu0 0.0
    %977 = vmatpush2.msra.mxu0 0.0
    %978 = vmatprep.mubr.f32.mxu0 0.0
    %979 = vmatmul.mubr.f32.gmra.mxu0 %v912
    %v980 = vpop.f32.mrf.mxu0
    %v981 = vadd.f32 0.0, %v980
    %v982 = vpop.f32.mrf.mxu0
    %v983 = vadd.f32 0.0, %v982
    %984 = vdwg.mxu0
    %985 = vmatprep.subr.mxu0 0.0
    %986 = vmatpush1.msra.mxu0 0.0
    %987 = vmatprep.subr.mxu0 0.0
    %988 = vmatpush1.msra.mxu0 0.0
    %989 = vmatprep.subr.mxu0 0.0
    %990 = vmatpush1.msra.mxu0 0.0
    %991 = vmatprep.subr.mxu0 0.0
    %992 = vmatpush1.msra.mxu0 0.0
    %993 = vmatprep.subr.mxu0 0.0
    %994 = vmatpush1.msra.mxu0 0.0
    %995 = vmatprep.subr.mxu0 0.0
    %996 = vmatpush1.msra.mxu0 0.0
    %997 = vmatprep.subr.mxu0 0.0
    %998 = vmatpush1.msra.mxu0 0.0
    %999 = vmatprep.subr.mxu0 0.0
    %1000 = vmatpush1.msra.mxu0 0.0
    %1001 = vmatprep.subr.mxu0 %v905
    %1002 = vmatpush1.msra.mxu0 %v904
    %1003 = vmatprep.subr.mxu0 %v897
    %1004 = vmatpush1.msra.mxu0 %v896
    %1005 = vmatprep.subr.mxu0 %v889
    %1006 = vmatpush1.msra.mxu0 %v888
    %1007 = vmatprep.subr.mxu0 %v881
    %1008 = vmatpush1.msra.mxu0 %v880
    %1009 = vmatprep.subr.mxu0 %v873
    %1010 = vmatpush1.msra.mxu0 %v872
    %1011 = vmatprep.subr.mxu0 %v865
    %1012 = vmatpush1.msra.mxu0 %v864
    %1013 = vmatprep.subr.mxu0 %v857
    %1014 = vmatpush1.msra.mxu0 %v856
    %1015 = vmatprep.subr.mxu0 %v849
    %1016 = vmatpush1.msra.mxu0 %v848
    %1017 = vmatprep.subr.mxu0 0.0
    %1018 = vmatpush2.msra.mxu0 0.0
    %1019 = vmatprep.subr.mxu0 0.0
    %1020 = vmatpush2.msra.mxu0 0.0
    %1021 = vmatprep.subr.mxu0 0.0
    %1022 = vmatpush2.msra.mxu0 0.0
    %1023 = vmatprep.subr.mxu0 0.0
    %1024 = vmatpush2.msra.mxu0 0.0
    %1025 = vmatprep.subr.mxu0 0.0
    %1026 = vmatpush2.msra.mxu0 0.0
    %1027 = vmatprep.subr.mxu0 0.0
    %1028 = vmatpush2.msra.mxu0 0.0
    %1029 = vmatprep.subr.mxu0 0.0
    %1030 = vmatpush2.msra.mxu0 0.0
    %1031 = vmatprep.subr.mxu0 0.0
    %1032 = vmatpush2.msra.mxu0 0.0
    %1033 = vmatprep.subr.mxu0 0.0
    %1034 = vmatpush2.msra.mxu0 0.0
    %1035 = vmatprep.subr.mxu0 0.0
    %1036 = vmatpush2.msra.mxu0 0.0
    %1037 = vmatprep.subr.mxu0 0.0
    %1038 = vmatpush2.msra.mxu0 0.0
    %1039 = vmatprep.subr.mxu0 0.0
    %1040 = vmatpush2.msra.mxu0 0.0
    %1041 = vmatprep.subr.mxu0 0.0
    %1042 = vmatpush2.msra.mxu0 0.0
    %1043 = vmatprep.subr.mxu0 0.0
    %1044 = vmatpush2.msra.mxu0 0.0
    %1045 = vmatprep.subr.mxu0 0.0
    %1046 = vmatpush2.msra.mxu0 0.0
    %1047 = vmatprep.subr.mxu0 0.0
    %1048 = vmatpush2.msra.mxu0 0.0
    %1049 = vmatprep.mubr.f32.mxu0 0.0
    %1050 = vmatmul.mubr.f32.gmra.mxu0 %v912
    %v1051 = vpop.f32.mrf.mxu0
    %v1052 = vadd.f32 0.0, %v1051
    %v1053 = vpop.f32.mrf.mxu0
    %v1054 = vadd.f32 0.0, %v1053
    %1055 = vdwg.mxu0
    %1056 = vmatprep.subr.mxu0 0.0
    %1057 = vmatpush1.msra.mxu0 0.0
    %1058 = vmatprep.subr.mxu0 0.0
    %1059 = vmatpush1.msra.mxu0 0.0
    %1060 = vmatprep.subr.mxu0 0.0
    %1061 = vmatpush1.msra.mxu0 0.0
    %1062 = vmatprep.subr.mxu0 0.0
    %1063 = vmatpush1.msra.mxu0 0.0
    %1064 = vmatprep.subr.mxu0 0.0
    %1065 = vmatpush1.msra.mxu0 0.0
    %1066 = vmatprep.subr.mxu0 0.0
    %1067 = vmatpush1.msra.mxu0 0.0
    %1068 = vmatprep.subr.mxu0 0.0
    %1069 = vmatpush1.msra.mxu0 0.0
    %1070 = vmatprep.subr.mxu0 0.0
    %1071 = vmatpush1.msra.mxu0 0.0
    %1072 = vmatprep.subr.mxu0 %v907
    %1073 = vmatpush1.msra.mxu0 %v906
    %1074 = vmatprep.subr.mxu0 %v899
    %1075 = vmatpush1.msra.mxu0 %v898
    %1076 = vmatprep.subr.mxu0 %v891
    %1077 = vmatpush1.msra.mxu0 %v890
    %1078 = vmatprep.subr.mxu0 %v883
    %1079 = vmatpush1.msra.mxu0 %v882
    %1080 = vmatprep.subr.mxu0 %v875
    %1081 = vmatpush1.msra.mxu0 %v874
    %1082 = vmatprep.subr.mxu0 %v867
    %1083 = vmatpush1.msra.mxu0 %v866
    %1084 = vmatprep.subr.mxu0 %v859
    %1085 = vmatpush1.msra.mxu0 %v858
    %1086 = vmatprep.subr.mxu0 %v851
    %1087 = vmatpush1.msra.mxu0 %v850
    %1088 = vmatprep.subr.mxu0 0.0
    %1089 = vmatpush2.msra.mxu0 0.0
    %1090 = vmatprep.subr.mxu0 0.0
    %1091 = vmatpush2.msra.mxu0 0.0
    %1092 = vmatprep.subr.mxu0 0.0
    %1093 = vmatpush2.msra.mxu0 0.0
    %1094 = vmatprep.subr.mxu0 0.0
    %1095 = vmatpush2.msra.mxu0 0.0
    %1096 = vmatprep.subr.mxu0 0.0
    %1097 = vmatpush2.msra.mxu0 0.0
    %1098 = vmatprep.subr.mxu0 0.0
    %1099 = vmatpush2.msra.mxu0 0.0
    %1100 = vmatprep.subr.mxu0 0.0
    %1101 = vmatpush2.msra.mxu0 0.0
    %1102 = vmatprep.subr.mxu0 0.0
    %1103 = vmatpush2.msra.mxu0 0.0
    %1104 = vmatprep.subr.mxu0 0.0
    %1105 = vmatpush2.msra.mxu0 0.0
    %1106 = vmatprep.subr.mxu0 0.0
    %1107 = vmatpush2.msra.mxu0 0.0
    %1108 = vmatprep.subr.mxu0 0.0
    %1109 = vmatpush2.msra.mxu0 0.0
    %1110 = vmatprep.subr.mxu0 0.0
    %1111 = vmatpush2.msra.mxu0 0.0
    %1112 = vmatprep.subr.mxu0 0.0
    %1113 = vmatpush2.msra.mxu0 0.0
    %1114 = vmatprep.subr.mxu0 0.0
    %1115 = vmatpush2.msra.mxu0 0.0
    %1116 = vmatprep.subr.mxu0 0.0
    %1117 = vmatpush2.msra.mxu0 0.0
    %1118 = vmatprep.subr.mxu0 0.0
    %1119 = vmatpush2.msra.mxu0 0.0
    %1120 = vmatprep.mubr.f32.mxu0 0.0
    %1121 = vmatmul.mubr.f32.gmra.mxu0 %v912
    %v1122 = vpop.f32.mrf.mxu0
    %v1123 = vadd.f32 0.0, %v1122
    %v1124 = vpop.f32.mrf.mxu0
    %v1125 = vadd.f32 0.0, %v1124
    %1126 = vdwg.mxu0
    %1127 = vmatprep.subr.mxu0 0.0
    %1128 = vmatpush1.msra.mxu0 0.0
    %1129 = vmatprep.subr.mxu0 0.0
    %1130 = vmatpush1.msra.mxu0 0.0
    %1131 = vmatprep.subr.mxu0 0.0
    %1132 = vmatpush1.msra.mxu0 0.0
    %1133 = vmatprep.subr.mxu0 0.0
    %1134 = vmatpush1.msra.mxu0 0.0
    %1135 = vmatprep.subr.mxu0 0.0
    %1136 = vmatpush1.msra.mxu0 0.0
    %1137 = vmatprep.subr.mxu0 0.0
    %1138 = vmatpush1.msra.mxu0 0.0
    %1139 = vmatprep.subr.mxu0 0.0
    %1140 = vmatpush1.msra.mxu0 0.0
    %1141 = vmatprep.subr.mxu0 0.0
    %1142 = vmatpush1.msra.mxu0 0.0
    %1143 = vmatprep.subr.mxu0 %v909
    %1144 = vmatpush1.msra.mxu0 %v908
    %1145 = vmatprep.subr.mxu0 %v901
    %1146 = vmatpush1.msra.mxu0 %v900
    %1147 = vmatprep.subr.mxu0 %v893
    %1148 = vmatpush1.msra.mxu0 %v892
    %1149 = vmatprep.subr.mxu0 %v885
    %1150 = vmatpush1.msra.mxu0 %v884
    %1151 = vmatprep.subr.mxu0 %v877
    %1152 = vmatpush1.msra.mxu0 %v876
    %1153 = vmatprep.subr.mxu0 %v869
    %1154 = vmatpush1.msra.mxu0 %v868
    %1155 = vmatprep.subr.mxu0 %v861
    %1156 = vmatpush1.msra.mxu0 %v860
    %1157 = vmatprep.subr.mxu0 %v853
    %1158 = vmatpush1.msra.mxu0 %v852
    %1159 = vmatprep.subr.mxu0 0.0
    %1160 = vmatpush2.msra.mxu0 0.0
    %1161 = vmatprep.subr.mxu0 0.0
    %1162 = vmatpush2.msra.mxu0 0.0
    %1163 = vmatprep.subr.mxu0 0.0
    %1164 = vmatpush2.msra.mxu0 0.0
    %1165 = vmatprep.subr.mxu0 0.0
    %1166 = vmatpush2.msra.mxu0 0.0
    %1167 = vmatprep.subr.mxu0 0.0
    %1168 = vmatpush2.msra.mxu0 0.0
    %1169 = vmatprep.subr.mxu0 0.0
    %1170 = vmatpush2.msra.mxu0 0.0
    %1171 = vmatprep.subr.mxu0 0.0
    %1172 = vmatpush2.msra.mxu0 0.0
    %1173 = vmatprep.subr.mxu0 0.0
    %1174 = vmatpush2.msra.mxu0 0.0
    %1175 = vmatprep.subr.mxu0 0.0
    %1176 = vmatpush2.msra.mxu0 0.0
    %1177 = vmatprep.subr.mxu0 0.0
    %1178 = vmatpush2.msra.mxu0 0.0
    %1179 = vmatprep.subr.mxu0 0.0
    %1180 = vmatpush2.msra.mxu0 0.0
    %1181 = vmatprep.subr.mxu0 0.0
    %1182 = vmatpush2.msra.mxu0 0.0
    %1183 = vmatprep.subr.mxu0 0.0
    %1184 = vmatpush2.msra.mxu0 0.0
    %1185 = vmatprep.subr.mxu0 0.0
    %1186 = vmatpush2.msra.mxu0 0.0
    %1187 = vmatprep.subr.mxu0 0.0
    %1188 = vmatpush2.msra.mxu0 0.0
    %1189 = vmatprep.subr.mxu0 0.0
    %1190 = vmatpush2.msra.mxu0 0.0
    %1191 = vmatprep.mubr.f32.mxu0 0.0
    %1192 = vmatmul.mubr.f32.gmra.mxu0 %v912
    %v1193 = vpop.f32.mrf.mxu0
    %v1194 = vadd.f32 0.0, %v1193
    %v1195 = vpop.f32.mrf.mxu0
    %v1196 = vadd.f32 0.0, %v1195
    %1197 = vdwg.mxu0
    %v1198 = vld [vmem:[#allocation7] sm:$0xff]
    %v1199 = vld [vmem:[#allocation7 + $0x8] sm:$0xff]
    %v1200 = vld [vmem:[#allocation7 + $0x10] sm:$0xff]
    %v1201 = vld [vmem:[#allocation7 + $0x18] sm:$0xff]
    %v1202 = vld [vmem:[#allocation7 + $0x20] sm:$0xff]
    %v1203 = vld [vmem:[#allocation7 + $0x28] sm:$0xff]
    %v1204 = vld [vmem:[#allocation7 + $0x30] sm:$0xff]
    %v1205 = vld [vmem:[#allocation7 + $0x38] sm:$0xff]
    %v1206 = vld [vmem:[#allocation7 + $0x40] sm:$0xff]
    %v1207 = vld [vmem:[#allocation7 + $0x48] sm:$0xff]
    %v1208 = vld [vmem:[#allocation7 + $0x50] sm:$0xff]
    %v1209 = vld [vmem:[#allocation7 + $0x58] sm:$0xff]
    %v1210 = vld [vmem:[#allocation7 + $0x60] sm:$0xff]
    %v1211 = vld [vmem:[#allocation7 + $0x68] sm:$0xff]
    %v1212 = vld [vmem:[#allocation7 + $0x70] sm:$0xff]
    %v1213 = vld [vmem:[#allocation7 + $0x78] sm:$0xff]
    %v1214 = vld [vmem:[#allocation7 + $0x80] sm:$0xff]
    %v1215 = vld [vmem:[#allocation7 + $0x88] sm:$0xff]
    %v1216 = vld [vmem:[#allocation7 + $0x90] sm:$0xff]
    %v1217 = vld [vmem:[#allocation7 + $0x98] sm:$0xff]
    %v1218 = vld [vmem:[#allocation7 + $0xa0] sm:$0xff]
    %v1219 = vld [vmem:[#allocation7 + $0xa8] sm:$0xff]
    %v1220 = vld [vmem:[#allocation7 + $0xb0] sm:$0xff]
    %v1221 = vld [vmem:[#allocation7 + $0xb8] sm:$0xff]
    %v1222 = vld [vmem:[#allocation7 + $0xc0] sm:$0xff]
    %v1223 = vld [vmem:[#allocation7 + $0xc8] sm:$0xff]
    %v1224 = vld [vmem:[#allocation7 + $0xd0] sm:$0xff]
    %v1225 = vld [vmem:[#allocation7 + $0xd8] sm:$0xff]
    %v1226 = vld [vmem:[#allocation7 + $0xe0] sm:$0xff]
    %v1227 = vld [vmem:[#allocation7 + $0xe8] sm:$0xff]
    %v1228 = vld [vmem:[#allocation7 + $0xf0] sm:$0xff]
    %v1229 = vld [vmem:[#allocation7 + $0xf8] sm:$0xff]
    %v1230 = vld [vmem:[#allocation7 + $0x100] sm:$0xff]
    %v1231 = vld [vmem:[#allocation7 + $0x108] sm:$0xff]
    %v1232 = vld [vmem:[#allocation7 + $0x110] sm:$0xff]
    %v1233 = vld [vmem:[#allocation7 + $0x118] sm:$0xff]
    %v1234 = vld [vmem:[#allocation7 + $0x120] sm:$0xff]
    %v1235 = vld [vmem:[#allocation7 + $0x128] sm:$0xff]
    %v1236 = vld [vmem:[#allocation7 + $0x130] sm:$0xff]
    %v1237 = vld [vmem:[#allocation7 + $0x138] sm:$0xff]
    %v1238 = vld [vmem:[#allocation7 + $0x140] sm:$0xff]
    %v1239 = vld [vmem:[#allocation7 + $0x148] sm:$0xff]
    %v1240 = vld [vmem:[#allocation7 + $0x150] sm:$0xff]
    %v1241 = vld [vmem:[#allocation7 + $0x158] sm:$0xff]
    %v1242 = vld [vmem:[#allocation7 + $0x160] sm:$0xff]
    %v1243 = vld [vmem:[#allocation7 + $0x168] sm:$0xff]
    %v1244 = vld [vmem:[#allocation7 + $0x170] sm:$0xff]
    %v1245 = vld [vmem:[#allocation7 + $0x178] sm:$0xff]
    %v1246 = vld [vmem:[#allocation7 + $0x180] sm:$0xff]
    %v1247 = vld [vmem:[#allocation7 + $0x188] sm:$0xff]
    %v1248 = vld [vmem:[#allocation7 + $0x190] sm:$0xff]
    %v1249 = vld [vmem:[#allocation7 + $0x198] sm:$0xff]
    %v1250 = vld [vmem:[#allocation7 + $0x1a0] sm:$0xff]
    %v1251 = vld [vmem:[#allocation7 + $0x1a8] sm:$0xff]
    %v1252 = vld [vmem:[#allocation7 + $0x1b0] sm:$0xff]
    %v1253 = vld [vmem:[#allocation7 + $0x1b8] sm:$0xff]
    %v1254 = vld [vmem:[#allocation7 + $0x1c0] sm:$0xff]
    %v1255 = vld [vmem:[#allocation7 + $0x1c8] sm:$0xff]
    %v1256 = vld [vmem:[#allocation7 + $0x1d0] sm:$0xff]
    %v1257 = vld [vmem:[#allocation7 + $0x1d8] sm:$0xff]
    %v1258 = vld [vmem:[#allocation7 + $0x1e0] sm:$0xff]
    %v1259 = vld [vmem:[#allocation7 + $0x1e8] sm:$0xff]
    %v1260 = vld [vmem:[#allocation7 + $0x1f0] sm:$0xff]
    %v1261 = vld [vmem:[#allocation7 + $0x1f8] sm:$0xff]
    %v1263 = vsel %vm910, %v845, 0
    %1265 = vmatprep.subr.mxu0 0.0
    %1266 = vmatpush1.msra.mxu0 0.0
    %1267 = vmatprep.subr.mxu0 0.0
    %1268 = vmatpush1.msra.mxu0 0.0
    %1269 = vmatprep.subr.mxu0 0.0
    %1270 = vmatpush1.msra.mxu0 0.0
    %1271 = vmatprep.subr.mxu0 0.0
    %1272 = vmatpush1.msra.mxu0 0.0
    %1273 = vmatprep.subr.mxu0 0.0
    %1274 = vmatpush1.msra.mxu0 0.0
    %1275 = vmatprep.subr.mxu0 0.0
    %1276 = vmatpush1.msra.mxu0 0.0
    %1277 = vmatprep.subr.mxu0 0.0
    %1278 = vmatpush1.msra.mxu0 0.0
    %1279 = vmatprep.subr.mxu0 0.0
    %1280 = vmatpush1.msra.mxu0 0.0
    %1281 = vmatprep.subr.mxu0 %v1255
    %1282 = vmatpush1.msra.mxu0 %v1254
    %1283 = vmatprep.subr.mxu0 %v1247
    %1284 = vmatpush1.msra.mxu0 %v1246
    %1285 = vmatprep.subr.mxu0 %v1239
    %1286 = vmatpush1.msra.mxu0 %v1238
    %1287 = vmatprep.subr.mxu0 %v1231
    %1288 = vmatpush1.msra.mxu0 %v1230
    %1289 = vmatprep.subr.mxu0 %v1223
    %1290 = vmatpush1.msra.mxu0 %v1222
    %1291 = vmatprep.subr.mxu0 %v1215
    %1292 = vmatpush1.msra.mxu0 %v1214
    %1293 = vmatprep.subr.mxu0 %v1207
    %1294 = vmatpush1.msra.mxu0 %v1206
    %1295 = vmatprep.subr.mxu0 %v1199
    %1296 = vmatpush1.msra.mxu0 %v1198
    %1297 = vmatprep.subr.mxu0 0.0
    %1298 = vmatpush2.msra.mxu0 0.0
    %1299 = vmatprep.subr.mxu0 0.0
    %1300 = vmatpush2.msra.mxu0 0.0
    %1301 = vmatprep.subr.mxu0 0.0
    %1302 = vmatpush2.msra.mxu0 0.0
    %1303 = vmatprep.subr.mxu0 0.0
    %1304 = vmatpush2.msra.mxu0 0.0
    %1305 = vmatprep.subr.mxu0 0.0
    %1306 = vmatpush2.msra.mxu0 0.0
    %1307 = vmatprep.subr.mxu0 0.0
    %1308 = vmatpush2.msra.mxu0 0.0
    %1309 = vmatprep.subr.mxu0 0.0
    %1310 = vmatpush2.msra.mxu0 0.0
    %1311 = vmatprep.subr.mxu0 0.0
    %1312 = vmatpush2.msra.mxu0 0.0
    %1313 = vmatprep.subr.mxu0 0.0
    %1314 = vmatpush2.msra.mxu0 0.0
    %1315 = vmatprep.subr.mxu0 0.0
    %1316 = vmatpush2.msra.mxu0 0.0
    %1317 = vmatprep.subr.mxu0 0.0
    %1318 = vmatpush2.msra.mxu0 0.0
    %1319 = vmatprep.subr.mxu0 0.0
    %1320 = vmatpush2.msra.mxu0 0.0
    %1321 = vmatprep.subr.mxu0 0.0
    %1322 = vmatpush2.msra.mxu0 0.0
    %1323 = vmatprep.subr.mxu0 0.0
    %1324 = vmatpush2.msra.mxu0 0.0
    %1325 = vmatprep.subr.mxu0 0.0
    %1326 = vmatpush2.msra.mxu0 0.0
    %1327 = vmatprep.subr.mxu0 0.0
    %1328 = vmatpush2.msra.mxu0 0.0
    %1329 = vmatprep.mubr.f32.mxu0 0.0
    %1330 = vmatmul.mubr.f32.gmra.mxu0 %v1263
    %v1331 = vpop.f32.mrf.mxu0
    %v1332 = vadd.f32 0.0, %v1331
    %v1333 = vpop.f32.mrf.mxu0
    %v1334 = vadd.f32 0.0, %v1333
    %1335 = vdwg.mxu0
    %1336 = vmatprep.subr.mxu0 0.0
    %1337 = vmatpush1.msra.mxu0 0.0
    %1338 = vmatprep.subr.mxu0 0.0
    %1339 = vmatpush1.msra.mxu0 0.0
    %1340 = vmatprep.subr.mxu0 0.0
    %1341 = vmatpush1.msra.mxu0 0.0
    %1342 = vmatprep.subr.mxu0 0.0
    %1343 = vmatpush1.msra.mxu0 0.0
    %1344 = vmatprep.subr.mxu0 0.0
    %1345 = vmatpush1.msra.mxu0 0.0
    %1346 = vmatprep.subr.mxu0 0.0
    %1347 = vmatpush1.msra.mxu0 0.0
    %1348 = vmatprep.subr.mxu0 0.0
    %1349 = vmatpush1.msra.mxu0 0.0
    %1350 = vmatprep.subr.mxu0 0.0
    %1351 = vmatpush1.msra.mxu0 0.0
    %1352 = vmatprep.subr.mxu0 %v1257
    %1353 = vmatpush1.msra.mxu0 %v1256
    %1354 = vmatprep.subr.mxu0 %v1249
    %1355 = vmatpush1.msra.mxu0 %v1248
    %1356 = vmatprep.subr.mxu0 %v1241
    %1357 = vmatpush1.msra.mxu0 %v1240
    %1358 = vmatprep.subr.mxu0 %v1233
    %1359 = vmatpush1.msra.mxu0 %v1232
    %1360 = vmatprep.subr.mxu0 %v1225
    %1361 = vmatpush1.msra.mxu0 %v1224
    %1362 = vmatprep.subr.mxu0 %v1217
    %1363 = vmatpush1.msra.mxu0 %v1216
    %1364 = vmatprep.subr.mxu0 %v1209
    %1365 = vmatpush1.msra.mxu0 %v1208
    %1366 = vmatprep.subr.mxu0 %v1201
    %1367 = vmatpush1.msra.mxu0 %v1200
    %1368 = vmatprep.subr.mxu0 0.0
    %1369 = vmatpush2.msra.mxu0 0.0
    %1370 = vmatprep.subr.mxu0 0.0
    %1371 = vmatpush2.msra.mxu0 0.0
    %1372 = vmatprep.subr.mxu0 0.0
    %1373 = vmatpush2.msra.mxu0 0.0
    %1374 = vmatprep.subr.mxu0 0.0
    %1375 = vmatpush2.msra.mxu0 0.0
    %1376 = vmatprep.subr.mxu0 0.0
    %1377 = vmatpush2.msra.mxu0 0.0
    %1378 = vmatprep.subr.mxu0 0.0
    %1379 = vmatpush2.msra.mxu0 0.0
    %1380 = vmatprep.subr.mxu0 0.0
    %1381 = vmatpush2.msra.mxu0 0.0
    %1382 = vmatprep.subr.mxu0 0.0
    %1383 = vmatpush2.msra.mxu0 0.0
    %1384 = vmatprep.subr.mxu0 0.0
    %1385 = vmatpush2.msra.mxu0 0.0
    %1386 = vmatprep.subr.mxu0 0.0
    %1387 = vmatpush2.msra.mxu0 0.0
    %1388 = vmatprep.subr.mxu0 0.0
    %1389 = vmatpush2.msra.mxu0 0.0
    %1390 = vmatprep.subr.mxu0 0.0
    %1391 = vmatpush2.msra.mxu0 0.0
    %1392 = vmatprep.subr.mxu0 0.0
    %1393 = vmatpush2.msra.mxu0 0.0
    %1394 = vmatprep.subr.mxu0 0.0
    %1395 = vmatpush2.msra.mxu0 0.0
    %1396 = vmatprep.subr.mxu0 0.0
    %1397 = vmatpush2.msra.mxu0 0.0
    %1398 = vmatprep.subr.mxu0 0.0
    %1399 = vmatpush2.msra.mxu0 0.0
    %1400 = vmatprep.mubr.f32.mxu0 0.0
    %1401 = vmatmul.mubr.f32.gmra.mxu0 %v1263
    %v1402 = vpop.f32.mrf.mxu0
    %v1403 = vadd.f32 0.0, %v1402
    %v1404 = vpop.f32.mrf.mxu0
    %v1405 = vadd.f32 0.0, %v1404
    %1406 = vdwg.mxu0
    %1407 = vmatprep.subr.mxu0 0.0
    %1408 = vmatpush1.msra.mxu0 0.0
    %1409 = vmatprep.subr.mxu0 0.0
    %1410 = vmatpush1.msra.mxu0 0.0
    %1411 = vmatprep.subr.mxu0 0.0
    %1412 = vmatpush1.msra.mxu0 0.0
    %1413 = vmatprep.subr.mxu0 0.0
    %1414 = vmatpush1.msra.mxu0 0.0
    %1415 = vmatprep.subr.mxu0 0.0
    %1416 = vmatpush1.msra.mxu0 0.0
    %1417 = vmatprep.subr.mxu0 0.0
    %1418 = vmatpush1.msra.mxu0 0.0
    %1419 = vmatprep.subr.mxu0 0.0
    %1420 = vmatpush1.msra.mxu0 0.0
    %1421 = vmatprep.subr.mxu0 0.0
    %1422 = vmatpush1.msra.mxu0 0.0
    %1423 = vmatprep.subr.mxu0 %v1259
    %1424 = vmatpush1.msra.mxu0 %v1258
    %1425 = vmatprep.subr.mxu0 %v1251
    %1426 = vmatpush1.msra.mxu0 %v1250
    %1427 = vmatprep.subr.mxu0 %v1243
    %1428 = vmatpush1.msra.mxu0 %v1242
    %1429 = vmatprep.subr.mxu0 %v1235
    %1430 = vmatpush1.msra.mxu0 %v1234
    %1431 = vmatprep.subr.mxu0 %v1227
    %1432 = vmatpush1.msra.mxu0 %v1226
    %1433 = vmatprep.subr.mxu0 %v1219
    %1434 = vmatpush1.msra.mxu0 %v1218
    %1435 = vmatprep.subr.mxu0 %v1211
    %1436 = vmatpush1.msra.mxu0 %v1210
    %1437 = vmatprep.subr.mxu0 %v1203
    %1438 = vmatpush1.msra.mxu0 %v1202
    %1439 = vmatprep.subr.mxu0 0.0
    %1440 = vmatpush2.msra.mxu0 0.0
    %1441 = vmatprep.subr.mxu0 0.0
    %1442 = vmatpush2.msra.mxu0 0.0
    %1443 = vmatprep.subr.mxu0 0.0
    %1444 = vmatpush2.msra.mxu0 0.0
    %1445 = vmatprep.subr.mxu0 0.0
    %1446 = vmatpush2.msra.mxu0 0.0
    %1447 = vmatprep.subr.mxu0 0.0
    %1448 = vmatpush2.msra.mxu0 0.0
    %1449 = vmatprep.subr.mxu0 0.0
    %1450 = vmatpush2.msra.mxu0 0.0
    %1451 = vmatprep.subr.mxu0 0.0
    %1452 = vmatpush2.msra.mxu0 0.0
    %1453 = vmatprep.subr.mxu0 0.0
    %1454 = vmatpush2.msra.mxu0 0.0
    %1455 = vmatprep.subr.mxu0 0.0
    %1456 = vmatpush2.msra.mxu0 0.0
    %1457 = vmatprep.subr.mxu0 0.0
    %1458 = vmatpush2.msra.mxu0 0.0
    %1459 = vmatprep.subr.mxu0 0.0
    %1460 = vmatpush2.msra.mxu0 0.0
    %1461 = vmatprep.subr.mxu0 0.0
    %1462 = vmatpush2.msra.mxu0 0.0
    %1463 = vmatprep.subr.mxu0 0.0
    %1464 = vmatpush2.msra.mxu0 0.0
    %1465 = vmatprep.subr.mxu0 0.0
    %1466 = vmatpush2.msra.mxu0 0.0
    %1467 = vmatprep.subr.mxu0 0.0
    %1468 = vmatpush2.msra.mxu0 0.0
    %1469 = vmatprep.subr.mxu0 0.0
    %1470 = vmatpush2.msra.mxu0 0.0
    %1471 = vmatprep.mubr.f32.mxu0 0.0
    %1472 = vmatmul.mubr.f32.gmra.mxu0 %v1263
    %v1473 = vpop.f32.mrf.mxu0
    %v1474 = vadd.f32 0.0, %v1473
    %v1475 = vpop.f32.mrf.mxu0
    %v1476 = vadd.f32 0.0, %v1475
    %1477 = vdwg.mxu0
    %1478 = vmatprep.subr.mxu0 0.0
    %1479 = vmatpush1.msra.mxu0 0.0
    %1480 = vmatprep.subr.mxu0 0.0
    %1481 = vmatpush1.msra.mxu0 0.0
    %1482 = vmatprep.subr.mxu0 0.0
    %1483 = vmatpush1.msra.mxu0 0.0
    %1484 = vmatprep.subr.mxu0 0.0
    %1485 = vmatpush1.msra.mxu0 0.0
    %1486 = vmatprep.subr.mxu0 0.0
    %1487 = vmatpush1.msra.mxu0 0.0
    %1488 = vmatprep.subr.mxu0 0.0
    %1489 = vmatpush1.msra.mxu0 0.0
    %1490 = vmatprep.subr.mxu0 0.0
    %1491 = vmatpush1.msra.mxu0 0.0
    %1492 = vmatprep.subr.mxu0 0.0
    %1493 = vmatpush1.msra.mxu0 0.0
    %1494 = vmatprep.subr.mxu0 %v1261
    %1495 = vmatpush1.msra.mxu0 %v1260
    %1496 = vmatprep.subr.mxu0 %v1253
    %1497 = vmatpush1.msra.mxu0 %v1252
    %1498 = vmatprep.subr.mxu0 %v1245
    %1499 = vmatpush1.msra.mxu0 %v1244
    %1500 = vmatprep.subr.mxu0 %v1237
    %1501 = vmatpush1.msra.mxu0 %v1236
    %1502 = vmatprep.subr.mxu0 %v1229
    %1503 = vmatpush1.msra.mxu0 %v1228
    %1504 = vmatprep.subr.mxu0 %v1221
    %1505 = vmatpush1.msra.mxu0 %v1220
    %1506 = vmatprep.subr.mxu0 %v1213
    %1507 = vmatpush1.msra.mxu0 %v1212
    %1508 = vmatprep.subr.mxu0 %v1205
    %1509 = vmatpush1.msra.mxu0 %v1204
    %1510 = vmatprep.subr.mxu0 0.0
    %1511 = vmatpush2.msra.mxu0 0.0
    %1512 = vmatprep.subr.mxu0 0.0
    %1513 = vmatpush2.msra.mxu0 0.0
    %1514 = vmatprep.subr.mxu0 0.0
    %1515 = vmatpush2.msra.mxu0 0.0
    %1516 = vmatprep.subr.mxu0 0.0
    %1517 = vmatpush2.msra.mxu0 0.0
    %1518 = vmatprep.subr.mxu0 0.0
    %1519 = vmatpush2.msra.mxu0 0.0
    %1520 = vmatprep.subr.mxu0 0.0
    %1521 = vmatpush2.msra.mxu0 0.0
    %1522 = vmatprep.subr.mxu0 0.0
    %1523 = vmatpush2.msra.mxu0 0.0
    %1524 = vmatprep.subr.mxu0 0.0
    %1525 = vmatpush2.msra.mxu0 0.0
    %1526 = vmatprep.subr.mxu0 0.0
    %1527 = vmatpush2.msra.mxu0 0.0
    %1528 = vmatprep.subr.mxu0 0.0
    %1529 = vmatpush2.msra.mxu0 0.0
    %1530 = vmatprep.subr.mxu0 0.0
    %1531 = vmatpush2.msra.mxu0 0.0
    %1532 = vmatprep.subr.mxu0 0.0
    %1533 = vmatpush2.msra.mxu0 0.0
    %1534 = vmatprep.subr.mxu0 0.0
    %1535 = vmatpush2.msra.mxu0 0.0
    %1536 = vmatprep.subr.mxu0 0.0
    %1537 = vmatpush2.msra.mxu0 0.0
    %1538 = vmatprep.subr.mxu0 0.0
    %1539 = vmatpush2.msra.mxu0 0.0
    %1540 = vmatprep.subr.mxu0 0.0
    %1541 = vmatpush2.msra.mxu0 0.0
    %1542 = vmatprep.mubr.f32.mxu0 0.0
    %1543 = vmatmul.mubr.f32.gmra.mxu0 %v1263
    %v1544 = vpop.f32.mrf.mxu0
    %v1545 = vadd.f32 0.0, %v1544
    %v1546 = vpop.f32.mrf.mxu0
    %v1547 = vadd.f32 0.0, %v1546
    %1548 = vdwg.mxu0
    %v1549 = vmul.f32 %v75, %v981
    %v1550 = vmul.f32 %v76, %v983
    %v1551 = vmul.f32 %v77, %v1052
    %v1552 = vmul.f32 %v78, %v1054
    %v1553 = vmul.f32 %v79, %v1123
    %v1554 = vmul.f32 %v80, %v1125
    %v1555 = vmul.f32 %v81, %v1194
    %v1556 = vmul.f32 %v82, %v1196
    %v1557 = vmul.f32 %v1549, %v1332
    %v1558 = vmul.f32 %v1550, %v1334
    %v1559 = vmul.f32 %v1551, %v1403
    %v1560 = vmul.f32 %v1552, %v1405
    %v1561 = vmul.f32 %v1553, %v1474
    %v1562 = vmul.f32 %v1554, %v1476
    %v1563 = vmul.f32 %v1555, %v1545
    %v1564 = vmul.f32 %v1556, %v1547
    %1565 = vst [vmem:[#allocation8] sm:$0xff] %v1557
    %1566 = vst [vmem:[#allocation8 + $0x8] sm:$0xff] %v1558
    %1567 = vst [vmem:[#allocation8 + $0x10] sm:$0xff] %v1559
    %1568 = vst [vmem:[#allocation8 + $0x18] sm:$0xff] %v1560
    %1569 = vst [vmem:[#allocation8 + $0x20] sm:$0xff] %v1561
    %1570 = vst [vmem:[#allocation8 + $0x28] sm:$0xff] %v1562
    %1571 = vst [vmem:[#allocation8 + $0x30] sm:$0xff] %v1563
    %1572 = vst [vmem:[#allocation8 + $0x38] sm:$0xff] %v1564
    // Predicated region
    $region54: #{tpu_custom_call.1} parent=1 // pred_check
      _
    $region55: #{tpu_custom_call.1} parent=1 // pred_check_branch
      %1574 = sbr.rel (0) target = $region57
    $region56: #{tpu_custom_call.1} parent=1 // pred_region
      %s1576 = ssub.s32 1024, 1024
      %1577 = vsyncadd [#allocation4], %s1576
      %s1579 = sshll.u32 [#allocation8], 4
      %s1580 = int_to_ptr.vmem [resolvable:$true] %s1579
      %1582 = dma.vmem_to_hbm [thread:$0]  %s1580, 1024, %s10, [#allocation4]
    $region57: #{tpu_custom_call.1} parent=1 // pred_fallthru
      _
    // Predicated region
    $region58: #{tpu_custom_call.1} parent=1 // pred_check
      _
    $region59: #{tpu_custom_call.1} parent=1 // pred_check_branch
      %1584 = sbr.rel (0) target = $region61
    $region60: #{tpu_custom_call.1} parent=1 // pred_region
      %1585 = dma.done [#allocation4], 1024
    $region61: #{tpu_custom_call.1} parent=1 // pred_fallthru
      _
    %1586 = vsyncpa [#allocation3], 1
    %1587 = vsyncpa [#allocation6], 1
    %1588 = vsyncpa [#allocation4], 1

</llo_original>
